<compile_context>
chip_gen: v5e
topology: v5e:2x2
jax: 0.10.0
libtpu: 0.0.40
codegen_flags: <defaults>
</compile_context>

<pallas_src>
import functools

import jax
import jax.numpy as jnp
from jax.experimental import pallas as pl
from jax.experimental.pallas import tpu as pltpu


# ----------------------------------------------------------------------------
# Fused per-tile kernel: conv+ReLU+avgpool encoder -> projector MLP ->
# conditional prior (normalize, Gaussian log-prob to centroids, softmax).
# Each grid step handles 2*tb rows: [tb rows of x_i ; tb matching rows of x_j].
# ----------------------------------------------------------------------------
def simclr_kernel(x_ref, bk_ref, bconv_ref, spool_ref, pool_ref,
                  w1_ref, b1_ref, w2_ref, b2_ref, means_ref, m2_ref,
                  out_ref, *, tb, custom, normalize, approx):
    f32 = jnp.float32
    mxu = x_ref.dtype  # bf16 on v6e/v7x, f32 in debug mode

    # --- encoder: 3x3 conv as three row-shifted GEMMs vs block-Toeplitz weights
    y = jnp.dot(x_ref[0], bk_ref[0], preferred_element_type=f32)
    y = y + jnp.dot(x_ref[1], bk_ref[1], preferred_element_type=f32)
    y = y + jnp.dot(x_ref[2], bk_ref[2], preferred_element_type=f32)
    y = jnp.maximum(y + bconv_ref[...], 0.0)                 # (2*tb*H, WFpad) f32

    # --- global average pool on the MXU (the 1/(H*W) factor is baked in spool)
    yw = jnp.dot(y.astype(mxu), spool_ref[...], preferred_element_type=f32)
    h = jnp.dot(pool_ref[...], yw.astype(mxu), preferred_element_type=f32)  # (2*tb, 128)

    # --- projector MLP: z = W2 @ relu(W1 @ h + b1) + b2   (padded to 128 lanes)
    a = jnp.maximum(
        jnp.dot(h.astype(mxu), w1_ref[...], preferred_element_type=f32) + b1_ref[...],
        0.0)
    z = jnp.dot(a.astype(mxu), w2_ref[...], preferred_element_type=f32) + b2_ref[...]

    if custom:
        if normalize:
            # Reference quirk (kept on purpose -- do NOT "fix"): BOTH halves
            # are scaled by 1/||z_i|| of the matching x_i row (first tb rows).
            # rsqrt(0) -> inf, same failure mode as the PyTorch reference.
            ni2 = jnp.sum(z[:tb] * z[:tb], axis=-1, keepdims=True)   # (tb, 1)
            inv = jax.lax.rsqrt(ni2)
            z = z * jnp.concatenate([inv, inv], axis=0)
        # -0.5*||z - m_k||^2 = -0.5*(||z||^2 - 2 z.m_k + ||m_k||^2).
        # m2_ref already carries +2e30 on the K-padding lanes, so those logits
        # underflow to exp(.) == 0 after the max shift (no extra masking op).
        zm = jnp.dot(z.astype(mxu), means_ref[...], preferred_element_type=f32)
        z2 = jnp.sum(z * z, axis=-1, keepdims=True)
        logp = -0.5 * (z2 - 2.0 * zm + m2_ref[...])
        logp = logp - jnp.max(logp, axis=-1, keepdims=True)
        e = jnp.exp(logp)
        denom = jnp.sum(e, axis=-1, keepdims=True)
        if approx:
            p_y = e * pl.reciprocal(denom, approx=True)   # EUP slot, ~free
        else:
            p_y = e / denom                               # exact (debug mode)
        out_ref[:, 256:384] = p_y

    # 128-aligned sub-slab stores -> plain unmasked vst
    out_ref[:, 0:128] = h
    out_ref[:, 128:256] = z


# ----------------------------------------------------------------------------
# Wrapper: layout plumbing (pre-shifted slabs, block-Toeplitz weights, padded
# projector/prior weights), a single batch-tiled pallas_call, and unpacking.
# ----------------------------------------------------------------------------
def simclr_forward(x_i, x_j, params, *, custom=True, normalize=True,
                   tile_b=None, mxu_dtype=jnp.float32, approx=True):
    f32 = jnp.float32
    B, C, H, W = x_i.shape
    F = params["w_conv"].shape[-1]
    HID = params["w1"].shape[-1]
    P = params["w2"].shape[-1]
    K = params["centroids"].shape[-1] if custom else 1
    NN = 2 * B

    tb = B if tile_b is None else tile_b
    assert B % tb == 0, "batch must be divisible by the tile size"
    ntiles = B // tb
    tbb = 2 * tb
    assert (tbb * H) % 8 == 0
    assert max(F, HID, P, K) <= 128  # TODO(synk): generalize to >128 feature dims

    CW = (W + 2) * C
    CWpad = pl.cdiv(CW, 128) * 128
    WF = W * F
    WFpad = pl.cdiv(WF, 128) * 128

    # ---- batch layout: group each tile as [tb rows of x_i ; tb rows of x_j]
    # so the shared-||z_i|| normalization is tile-local.
    xi_t = x_i.reshape(ntiles, tb, C, H, W)
    xj_t = x_j.reshape(ntiles, tb, C, H, W)
    x = jnp.concatenate([xi_t, xj_t], axis=1).reshape(NN, C, H, W).astype(f32)

    # NCHW -> padded NHWC with (w, c) merged, lane-padded 72 -> 128.
    xh = jnp.transpose(x, (0, 2, 3, 1))                       # (NN, H, W, C)
    xh = jnp.pad(xh, ((0, 0), (1, 1), (1, 1), (0, 0)))        # (NN, H+2, W+2, C)
    xh = xh.reshape(NN, H + 2, CW)
    xh = jnp.pad(xh, ((0, 0), (0, 0), (0, CWpad - CW)))
    # Three pre-shifted GEMM operands (one per conv-row offset) -> no in-kernel
    # per-image row gathering / sublane concat.
    xs = jnp.stack([xh[:, kh:kh + H, :].reshape(NN * H, CWpad) for kh in range(3)],
                   axis=0).astype(mxu_dtype)                  # (3, NN*H, CWpad)

    # ---- block-Toeplitz conv weights:
    #   bk[kh][wp*C + c, w*F + f] = w_conv[kh, wp-w, c, f]   (0 <= wp-w < 3)
    # Built directly with kron (no large 5-D transpose).  If the conv weights
    # are frozen (inference) hoist/cache bk outside the step.
    wc = params["w_conv"].astype(f32)                         # (3, 3, C, F)
    bk_rows = []
    for kh in range(3):
        bkh = jnp.zeros((CW, WF), f32)
        for kw in range(3):
            bkh = bkh + jnp.kron(jnp.eye(W + 2, W, k=-kw, dtype=f32), wc[kh, kw])
        bk_rows.append(bkh)
    bk = jnp.stack(bk_rows, axis=0)                           # (3, CW, WF)
    bk = jnp.pad(bk, ((0, 0), (0, CWpad - CW), (0, WFpad - WF))).astype(mxu_dtype)

    bconv = jnp.pad(jnp.tile(params["b_conv"].astype(f32), W),
                    (0, WFpad - WF)).reshape(1, WFpad)

    # pooling: sum over W (scaled by 1/(H*W)) then sum over the H rows of each
    # image in this tile -- both on the MXU, per-tile sized (no O(NN^2) operand).
    spool = jnp.zeros((WFpad, 128), f32).at[:WF, :F].set(
        jnp.tile(jnp.eye(F, dtype=f32), (W, 1)) / float(H * W)).astype(mxu_dtype)
    pool = jnp.kron(jnp.eye(tbb, dtype=f32), jnp.ones((1, H), f32)).astype(mxu_dtype)

    # projector / prior weights zero-padded to 128 lanes
    w1p = jnp.zeros((128, 128), f32).at[:F, :HID].set(params["w1"].astype(f32)).astype(mxu_dtype)
    b1p = jnp.zeros((1, 128), f32).at[0, :HID].set(params["b1"].astype(f32))
    w2p = jnp.zeros((128, 128), f32).at[:HID, :P].set(params["w2"].astype(f32)).astype(mxu_dtype)
    b2p = jnp.zeros((1, 128), f32).at[0, :P].set(params["b2"].astype(f32))
    means_p = jnp.zeros((128, 128), f32)
    if custom:
        means_p = means_p.at[:P, :K].set(params["centroids"][0].astype(f32))
    m2 = jnp.sum(means_p * means_p, axis=0, keepdims=True)
    # fold the K-padding mask into ||m_k||^2: padded logits -> huge negative -> p == 0
    m2 = m2 + jnp.where(jnp.arange(128) < K, 0.0, 2e30)[None, :].astype(f32)
    means_p = means_p.astype(mxu_dtype)

    slab_w = 384 if custom else 256
    const2 = lambda t: (0, 0)
    kern = functools.partial(simclr_kernel, tb=tb, custom=custom,
                             normalize=normalize, approx=approx)
    slab = pl.pallas_call(
        kern,
        out_shape=jax.ShapeDtypeStruct((NN, slab_w), f32),
        grid=(ntiles,),
        in_specs=[
            pl.BlockSpec((3, tbb * H, CWpad), lambda t: (0, t, 0)),  # activations (tiled)
            pl.BlockSpec((3, CWpad, WFpad), lambda t: (0, 0, 0)),    # conv weights (resident)
            pl.BlockSpec((1, WFpad), const2),                        # conv bias
            pl.BlockSpec((WFpad, 128), const2),                      # W-pooling matrix
            pl.BlockSpec((tbb, tbb * H), const2),                    # per-tile H-pooling matrix
            pl.BlockSpec((128, 128), const2),                        # w1 (padded)
            pl.BlockSpec((1, 128), const2),                          # b1
            pl.BlockSpec((128, 128), const2),                        # w2 (padded)
            pl.BlockSpec((1, 128), const2),                          # b2
            pl.BlockSpec((128, 128), const2),                        # centroids (padded)
            pl.BlockSpec((1, 128), const2),                          # ||m_k||^2 + K-pad mask
        ],
        out_specs=pl.BlockSpec((tbb, slab_w), lambda t: (t, 0)),
        compiler_params=pltpu.CompilerParams(
            dimension_semantics=("parallel",),
            vmem_limit_bytes=32 * 1024 * 1024),
    )(xs, bk, bconv, spool, pool, w1p, b1p, w2p, b2p, means_p, m2)

    # ---- unpack the lane-dense slab (tile-grouped row order -> original order)
    slab4 = slab.reshape(ntiles, 2, tb, slab_w)
    h_i = slab4[:, 0, :, 0:F].reshape(B, F)
    h_j = slab4[:, 1, :, 0:F].reshape(B, F)
    z_i = slab4[:, 0, :, 128:128 + P].reshape(B, P)
    z_j = slab4[:, 1, :, 128:128 + P].reshape(B, P)
    if custom:
        p_i = slab4[:, 0, :, 256:256 + K].reshape(B, K)
        p_j = slab4[:, 1, :, 256:256 + K].reshape(B, K)
        # the (B, P, K) class tiling of z is a free/lazy broadcast in XLA
        z_i = jnp.broadcast_to(z_i[:, :, None], (B, P, K))
        z_j = jnp.broadcast_to(z_j[:, :, None], (B, P, K))
        return p_i, p_j, h_i, h_j, z_i, z_j
    return None, None, h_i, h_j, z_i, z_j


# ----------------------------------------------------------------------------
# Pure-JAX reference (mirrors the PyTorch module, incl. the shared-||z_i|| quirk)
# ----------------------------------------------------------------------------
def reference_forward(x_i, x_j, params, *, custom=True, normalize=True):
    f32 = jnp.float32

    def encode(x):
        xh = jnp.transpose(x, (0, 2, 3, 1)).astype(f32)
        y = jax.lax.conv_general_dilated(
            xh, params["w_conv"].astype(f32), window_strides=(1, 1), padding="SAME",
            dimension_numbers=("NHWC", "HWIO", "NHWC"))
        y = jnp.maximum(y + params["b_conv"], 0.0)
        return jnp.mean(y, axis=(1, 2))

    def project(h):
        a = jnp.maximum(h @ params["w1"] + params["b1"], 0.0)
        return a @ params["w2"] + params["b2"]

    h_i, h_j = encode(x_i), encode(x_j)
    z_i, z_j = project(h_i), project(h_j)
    if not custom:
        return None, None, h_i, h_j, z_i, z_j
    if normalize:
        ni = jnp.sqrt(jnp.sum(z_i * z_i, axis=-1, keepdims=True))
        z_i, z_j = z_i / ni, z_j / ni     # reference quirk: both use ||z_i||
    means = params["centroids"][0]        # (P, K)

    def prior(z):
        d = z[:, :, None] - means[None]
        return jax.nn.softmax(-0.5 * jnp.sum(d * d, axis=1), axis=-1)

    K = means.shape[-1]
    zt_i = jnp.broadcast_to(z_i[:, :, None], (*z_i.shape, K))
    zt_j = jnp.broadcast_to(z_j[:, :, None], (*z_j.shape, K))
    return prior(z_i), prior(z_j), h_i, h_j, zt_i, zt_j


if __name__ == "__main__":
    key = jax.random.PRNGKey(0)
    ks = jax.random.split(key, 9)

    B, C, H, W = 8, 4, 16, 16          # per-view batch, in-channels, spatial
    F, HID, P, K = 32, 32, 16, 8       # n_features, proj hidden, proj dim, classes
    TB = 4                             # x_i rows per grid tile -> grid=(2,)

    x_i = jax.random.normal(ks[0], (B, C, H, W), jnp.float32)
    x_j = jax.random.normal(ks[1], (B, C, H, W), jnp.float32)
    params = {
        "w_conv": jax.random.normal(ks[2], (3, 3, C, F), jnp.float32) * 0.1,
        "b_conv": jax.random.normal(ks[3], (F,), jnp.float32) * 0.1,
        "w1": jax.random.normal(ks[4], (F, HID), jnp.float32) * 0.1,
        "b1": jax.random.normal(ks[5], (HID,), jnp.float32) * 0.1,
        "w2": jax.random.normal(ks[6], (HID, P), jnp.float32) * 0.1,
        "b2": jax.random.normal(ks[7], (P,), jnp.float32) * 0.1,
        # init_clusters with shape (1, proj_dim, classes)
        "centroids": jax.random.normal(ks[8], (1, P, K), jnp.float32) * 0.5,
    }

    # Debug path: f32 MXU operands + exact reciprocal -> tighter tolerance.
    fwd_f32 = jax.jit(functools.partial(
        simclr_forward, custom=True, normalize=True, tile_b=TB,
        mxu_dtype=jnp.float32, approx=False))
    out_f32 = fwd_f32(x_i, x_j, params)
    jax.block_until_ready(out_f32)

    # Production path (v6e/v7x): bf16 MXU operands, f32 accumulate + elementwise.
    fwd_bf16 = jax.jit(functools.partial(
        simclr_forward, custom=True, normalize=True, tile_b=TB,
        mxu_dtype=jnp.bfloat16, approx=True))
    out_bf16 = fwd_bf16(x_i, x_j, params)
    jax.block_until_ready(out_bf16)

    with jax.default_matmul_precision("highest"):
        ref = reference_forward(x_i, x_j, params, custom=True, normalize=True)
        ref = jax.block_until_ready(ref)

    # shape checks
    p_i, p_j, h_i, h_j, z_i, z_j = out_f32
    assert p_i.shape == (B, K) and p_j.shape == (B, K)
    assert h_i.shape == (B, F) and h_j.shape == (B, F)
    assert z_i.shape == (B, P, K) and z_j.shape == (B, P, K)

    names = ["p_y_z_i", "p_y_z_j", "h_i", "h_j", "z_i", "z_j"]
    for name, got, want in zip(names, out_f32, ref):
        assert got.shape == want.shape, (name, got.shape, want.shape)
        assert jnp.allclose(got, want, rtol=1e-2, atol=1e-2), \
            (name, float(jnp.max(jnp.abs(got - want))))
    for name, got, want in zip(names, out_bf16, ref):
        assert jnp.allclose(got, want, rtol=5e-2, atol=5e-2), \
            (name, float(jnp.max(jnp.abs(got - want))))

    print("KERNEL_OK")
</pallas_src>

<mosaic_0001>
module attributes {stable_mosaic.version = 11 : i64} {
  func.func @simclr_kernel(%arg0: i32, %arg1: memref<3x128x128xf32, #tpu.memory_space<vmem>>, %arg2: memref<3x128x512xf32, #tpu.memory_space<vmem>>, %arg3: memref<1x512xf32, #tpu.memory_space<vmem>>, %arg4: memref<512x128xf32, #tpu.memory_space<vmem>>, %arg5: memref<8x128xf32, #tpu.memory_space<vmem>>, %arg6: memref<128x128xf32, #tpu.memory_space<vmem>>, %arg7: memref<1x128xf32, #tpu.memory_space<vmem>>, %arg8: memref<128x128xf32, #tpu.memory_space<vmem>>, %arg9: memref<1x128xf32, #tpu.memory_space<vmem>>, %arg10: memref<128x128xf32, #tpu.memory_space<vmem>>, %arg11: memref<1x128xf32, #tpu.memory_space<vmem>>, %arg12: memref<8x384xf32, #tpu.memory_space<vmem>>) attributes {dimension_semantics = [#tpu.dimension_semantics<parallel>], iteration_bounds = array<i64: 2>, scalar_prefetch = 0 : i64, scratch_operands = 0 : i64, tpu.core_type = #tpu.core_type<tc>, window_params = [{transform_indices = @transform_0, window_bounds = array<i64: 3, 128, 128>}, {pipeline_mode = #tpu.pipeline_mode<synchronous>, transform_indices = @transform_1, window_bounds = array<i64: 3, 128, 512>}, {pipeline_mode = #tpu.pipeline_mode<synchronous>, transform_indices = @transform_2, window_bounds = array<i64: 1, 512>}, {pipeline_mode = #tpu.pipeline_mode<synchronous>, transform_indices = @transform_3, window_bounds = array<i64: 512, 128>}, {pipeline_mode = #tpu.pipeline_mode<synchronous>, transform_indices = @transform_4, window_bounds = array<i64: 8, 128>}, {pipeline_mode = #tpu.pipeline_mode<synchronous>, transform_indices = @transform_5, window_bounds = array<i64: 128, 128>}, {pipeline_mode = #tpu.pipeline_mode<synchronous>, transform_indices = @transform_6, window_bounds = array<i64: 1, 128>}, {pipeline_mode = #tpu.pipeline_mode<synchronous>, transform_indices = @transform_7, window_bounds = array<i64: 128, 128>}, {pipeline_mode = #tpu.pipeline_mode<synchronous>, transform_indices = @transform_8, window_bounds = array<i64: 1, 128>}, {pipeline_mode = #tpu.pipeline_mode<synchronous>, transform_indices = @transform_9, window_bounds = array<i64: 128, 128>}, {pipeline_mode = #tpu.pipeline_mode<synchronous>, transform_indices = @transform_10, window_bounds = array<i64: 1, 128>}, {transform_indices = @transform_11, window_bounds = array<i64: 8, 384>}]} {
    %c0 = arith.constant 0 : index
    %c0_0 = arith.constant 0 : index
    %c0_1 = arith.constant 0 : index
    %0 = vector.load %arg1[%c0, %c0_0, %c0_1] : memref<3x128x128xf32, #tpu.memory_space<vmem>>, vector<1x128x128xf32>
    %1 = vector.shape_cast %0 : vector<1x128x128xf32> to vector<128x128xf32>
    %c0_2 = arith.constant 0 : index
    %c0_3 = arith.constant 0 : index
    %c0_4 = arith.constant 0 : index
    %2 = vector.load %arg2[%c0_2, %c0_3, %c0_4] : memref<3x128x512xf32, #tpu.memory_space<vmem>>, vector<1x128x512xf32>
    %3 = vector.shape_cast %2 : vector<1x128x512xf32> to vector<128x512xf32>
    %cst = arith.constant dense<0.000000e+00> : vector<128x512xf32>
    %4 = tpu.matmul %1, %3, %cst {dimension_numbers = #tpu.dot_dimension_numbers<[1], [0], [0], [1], [0, 0, 1, 1], [], []>} : vector<128x128xf32>, vector<128x512xf32>, vector<128x512xf32> -> vector<128x512xf32>
    %c1 = arith.constant 1 : index
    %c0_5 = arith.constant 0 : index
    %c0_6 = arith.constant 0 : index
    %5 = vector.load %arg1[%c1, %c0_5, %c0_6] : memref<3x128x128xf32, #tpu.memory_space<vmem>>, vector<1x128x128xf32>
    %6 = vector.shape_cast %5 : vector<1x128x128xf32> to vector<128x128xf32>
    %c1_7 = arith.constant 1 : index
    %c0_8 = arith.constant 0 : index
    %c0_9 = arith.constant 0 : index
    %7 = vector.load %arg2[%c1_7, %c0_8, %c0_9] : memref<3x128x512xf32, #tpu.memory_space<vmem>>, vector<1x128x512xf32>
    %8 = vector.shape_cast %7 : vector<1x128x512xf32> to vector<128x512xf32>
    %cst_10 = arith.constant dense<0.000000e+00> : vector<128x512xf32>
    %9 = tpu.matmul %6, %8, %cst_10 {dimension_numbers = #tpu.dot_dimension_numbers<[1], [0], [0], [1], [0, 0, 1, 1], [], []>} : vector<128x128xf32>, vector<128x512xf32>, vector<128x512xf32> -> vector<128x512xf32>
    %10 = arith.addf %4, %9 : vector<128x512xf32>
    %c2 = arith.constant 2 : index
    %c0_11 = arith.constant 0 : index
    %c0_12 = arith.constant 0 : index
    %11 = vector.load %arg1[%c2, %c0_11, %c0_12] : memref<3x128x128xf32, #tpu.memory_space<vmem>>, vector<1x128x128xf32>
    %12 = vector.shape_cast %11 : vector<1x128x128xf32> to vector<128x128xf32>
    %c2_13 = arith.constant 2 : index
    %c0_14 = arith.constant 0 : index
    %c0_15 = arith.constant 0 : index
    %13 = vector.load %arg2[%c2_13, %c0_14, %c0_15] : memref<3x128x512xf32, #tpu.memory_space<vmem>>, vector<1x128x512xf32>
    %14 = vector.shape_cast %13 : vector<1x128x512xf32> to vector<128x512xf32>
    %cst_16 = arith.constant dense<0.000000e+00> : vector<128x512xf32>
    %15 = tpu.matmul %12, %14, %cst_16 {dimension_numbers = #tpu.dot_dimension_numbers<[1], [0], [0], [1], [0, 0, 1, 1], [], []>} : vector<128x128xf32>, vector<128x512xf32>, vector<128x512xf32> -> vector<128x512xf32>
    %16 = arith.addf %10, %15 : vector<128x512xf32>
    %c0_17 = arith.constant 0 : index
    %c0_18 = arith.constant 0 : index
    %17 = vector.load %arg3[%c0_17, %c0_18] : memref<1x512xf32, #tpu.memory_space<vmem>>, vector<1x512xf32>
    %18 = vector.broadcast %17 : vector<1x512xf32> to vector<128x512xf32>
    %19 = arith.addf %16, %18 : vector<128x512xf32>
    %cst_19 = arith.constant 0.000000e+00 : f32
    %20 = vector.broadcast %cst_19 : f32 to vector<128x512xf32>
    %21 = arith.maximumf %19, %20 : vector<128x512xf32>
    %c0_20 = arith.constant 0 : index
    %c0_21 = arith.constant 0 : index
    %22 = vector.load %arg4[%c0_20, %c0_21] : memref<512x128xf32, #tpu.memory_space<vmem>>, vector<512x128xf32>
    %cst_22 = arith.constant dense<0.000000e+00> : vector<128x128xf32>
    %23 = tpu.matmul %21, %22, %cst_22 {dimension_numbers = #tpu.dot_dimension_numbers<[1], [0], [0], [1], [0, 0, 1, 1], [], []>} : vector<128x512xf32>, vector<512x128xf32>, vector<128x128xf32> -> vector<128x128xf32>
    %c0_23 = arith.constant 0 : index
    %c0_24 = arith.constant 0 : index
    %24 = vector.load %arg5[%c0_23, %c0_24] : memref<8x128xf32, #tpu.memory_space<vmem>>, vector<8x128xf32>
    %cst_25 = arith.constant dense<0.000000e+00> : vector<8x128xf32>
    %25 = tpu.matmul %24, %23, %cst_25 {dimension_numbers = #tpu.dot_dimension_numbers<[1], [0], [0], [1], [0, 0, 1, 1], [], []>} : vector<8x128xf32>, vector<128x128xf32>, vector<8x128xf32> -> vector<8x128xf32>
    %c0_26 = arith.constant 0 : index
    %c0_27 = arith.constant 0 : index
    %26 = vector.load %arg6[%c0_26, %c0_27] : memref<128x128xf32, #tpu.memory_space<vmem>>, vector<128x128xf32>
    %cst_28 = arith.constant dense<0.000000e+00> : vector<8x128xf32>
    %27 = tpu.matmul %25, %26, %cst_28 {dimension_numbers = #tpu.dot_dimension_numbers<[1], [0], [0], [1], [0, 0, 1, 1], [], []>} : vector<8x128xf32>, vector<128x128xf32>, vector<8x128xf32> -> vector<8x128xf32>
    %c0_29 = arith.constant 0 : index
    %c0_30 = arith.constant 0 : index
    %28 = vector.load %arg7[%c0_29, %c0_30] : memref<1x128xf32, #tpu.memory_space<vmem>>, vector<1x128xf32>
    %29 = vector.broadcast %28 : vector<1x128xf32> to vector<8x128xf32>
    %30 = arith.addf %27, %29 : vector<8x128xf32>
    %cst_31 = arith.constant 0.000000e+00 : f32
    %31 = vector.broadcast %cst_31 : f32 to vector<8x128xf32>
    %32 = arith.maximumf %30, %31 : vector<8x128xf32>
    %c0_32 = arith.constant 0 : index
    %c0_33 = arith.constant 0 : index
    %33 = vector.load %arg8[%c0_32, %c0_33] : memref<128x128xf32, #tpu.memory_space<vmem>>, vector<128x128xf32>
    %cst_34 = arith.constant dense<0.000000e+00> : vector<8x128xf32>
    %34 = tpu.matmul %32, %33, %cst_34 {dimension_numbers = #tpu.dot_dimension_numbers<[1], [0], [0], [1], [0, 0, 1, 1], [], []>} : vector<8x128xf32>, vector<128x128xf32>, vector<8x128xf32> -> vector<8x128xf32>
    %c0_35 = arith.constant 0 : index
    %c0_36 = arith.constant 0 : index
    %35 = vector.load %arg9[%c0_35, %c0_36] : memref<1x128xf32, #tpu.memory_space<vmem>>, vector<1x128xf32>
    %36 = vector.broadcast %35 : vector<1x128xf32> to vector<8x128xf32>
    %37 = arith.addf %34, %36 : vector<8x128xf32>
    %38 = vector.extract_strided_slice %37 {offsets = [0, 0], sizes = [4, 128], strides = [1, 1]} : vector<8x128xf32> to vector<4x128xf32>
    %39 = vector.extract_strided_slice %37 {offsets = [0, 0], sizes = [4, 128], strides = [1, 1]} : vector<8x128xf32> to vector<4x128xf32>
    %40 = arith.mulf %38, %39 : vector<4x128xf32>
    %cst_37 = arith.constant dense<0.000000e+00> : vector<4xf32>
    %41 = vector.multi_reduction <add>, %40, %cst_37 [1] : vector<4x128xf32> to vector<4xf32>
    %42 = vector.shape_cast %41 : vector<4xf32> to vector<4x1xf32>
    %43 = math.rsqrt %42 : vector<4x1xf32>
    %44 = tpu.concatenate %43, %43 in 0 : vector<4x1xf32>, vector<4x1xf32> -> vector<8x1xf32>
    %45 = vector.broadcast %44 : vector<8x1xf32> to vector<8x128xf32>
    %46 = arith.mulf %37, %45 : vector<8x128xf32>
    %c0_38 = arith.constant 0 : index
    %c0_39 = arith.constant 0 : index
    %47 = vector.load %arg10[%c0_38, %c0_39] : memref<128x128xf32, #tpu.memory_space<vmem>>, vector<128x128xf32>
    %cst_40 = arith.constant dense<0.000000e+00> : vector<8x128xf32>
    %48 = tpu.matmul %46, %47, %cst_40 {dimension_numbers = #tpu.dot_dimension_numbers<[1], [0], [0], [1], [0, 0, 1, 1], [], []>} : vector<8x128xf32>, vector<128x128xf32>, vector<8x128xf32> -> vector<8x128xf32>
    %49 = arith.mulf %46, %46 : vector<8x128xf32>
    %cst_41 = arith.constant dense<0.000000e+00> : vector<8xf32>
    %50 = vector.multi_reduction <add>, %49, %cst_41 [1] : vector<8x128xf32> to vector<8xf32>
    %51 = vector.shape_cast %50 : vector<8xf32> to vector<8x1xf32>
    %cst_42 = arith.constant 2.000000e+00 : f32
    %52 = vector.broadcast %cst_42 : f32 to vector<8x128xf32>
    %53 = arith.mulf %52, %48 : vector<8x128xf32>
    %54 = vector.broadcast %51 : vector<8x1xf32> to vector<8x128xf32>
    %55 = arith.subf %54, %53 : vector<8x128xf32>
    %c0_43 = arith.constant 0 : index
    %c0_44 = arith.constant 0 : index
    %56 = vector.load %arg11[%c0_43, %c0_44] : memref<1x128xf32, #tpu.memory_space<vmem>>, vector<1x128xf32>
    %57 = vector.broadcast %56 : vector<1x128xf32> to vector<8x128xf32>
    %58 = arith.addf %55, %57 : vector<8x128xf32>
    %cst_45 = arith.constant -5.000000e-01 : f32
    %59 = vector.broadcast %cst_45 : f32 to vector<8x128xf32>
    %60 = arith.mulf %59, %58 : vector<8x128xf32>
    %cst_46 = arith.constant dense<0xFF800000> : vector<8xf32>
    %61 = vector.multi_reduction <maximumf>, %60, %cst_46 [1] : vector<8x128xf32> to vector<8xf32>
    %62 = vector.shape_cast %61 : vector<8xf32> to vector<8x1xf32>
    %63 = vector.broadcast %62 : vector<8x1xf32> to vector<8x128xf32>
    %64 = arith.subf %60, %63 : vector<8x128xf32>
    %65 = math.exp %64 : vector<8x128xf32>
    %cst_47 = arith.constant dense<0.000000e+00> : vector<8xf32>
    %66 = vector.multi_reduction <add>, %65, %cst_47 [1] : vector<8x128xf32> to vector<8xf32>
    %67 = vector.shape_cast %66 : vector<8xf32> to vector<8x1xf32>
    %68 = vector.broadcast %67 : vector<8x1xf32> to vector<8x128xf32>
    %69 = arith.divf %65, %68 : vector<8x128xf32>
    %c0_48 = arith.constant 0 : index
    %c256 = arith.constant 256 : index
    %70 = vector.load %arg12[%c0_48, %c256] : memref<8x384xf32, #tpu.memory_space<vmem>>, vector<8x128xf32>
    tpu.vector_store %arg12[%c0_48, %c256], %69 {strides = array<i32>} : memref<8x384xf32, #tpu.memory_space<vmem>>, vector<8x128xf32>,
    %c0_49 = arith.constant 0 : index
    %c0_50 = arith.constant 0 : index
    %71 = vector.load %arg12[%c0_49, %c0_50] : memref<8x384xf32, #tpu.memory_space<vmem>>, vector<8x128xf32>
    tpu.vector_store %arg12[%c0_49, %c0_50], %25 {strides = array<i32>} : memref<8x384xf32, #tpu.memory_space<vmem>>, vector<8x128xf32>,
    %c0_51 = arith.constant 0 : index
    %c128 = arith.constant 128 : index
    %72 = vector.load %arg12[%c0_51, %c128] : memref<8x384xf32, #tpu.memory_space<vmem>>, vector<8x128xf32>
    tpu.vector_store %arg12[%c0_51, %c128], %46 {strides = array<i32>} : memref<8x384xf32, #tpu.memory_space<vmem>>, vector<8x128xf32>,
    return
  }
  func.func @transform_0(%arg0: i32) -> (i32, i32, i32) {
    %c0_i32 = arith.constant 0 : i32
    %c0_i32_0 = arith.constant 0 : i32
    %c0_i32_1 = arith.constant 0 : i32
    return %c0_i32, %arg0, %c0_i32_0 : i32, i32, i32
  }
  func.func @transform_1(%arg0: i32) -> (i32, i32, i32) {
    %c0_i32 = arith.constant 0 : i32
    %c0_i32_0 = arith.constant 0 : i32
    %c0_i32_1 = arith.constant 0 : i32
    %c0_i32_2 = arith.constant 0 : i32
    return %c0_i32, %c0_i32_0, %c0_i32_1 : i32, i32, i32
  }
  func.func @transform_2(%arg0: i32) -> (i32, i32) {
    %c0_i32 = arith.constant 0 : i32
    %c0_i32_0 = arith.constant 0 : i32
    %c0_i32_1 = arith.constant 0 : i32
    return %c0_i32, %c0_i32_0 : i32, i32
  }
  func.func @transform_3(%arg0: i32) -> (i32, i32) {
    %c0_i32 = arith.constant 0 : i32
    %c0_i32_0 = arith.constant 0 : i32
    %c0_i32_1 = arith.constant 0 : i32
    return %c0_i32, %c0_i32_0 : i32, i32
  }
  func.func @transform_4(%arg0: i32) -> (i32, i32) {
    %c0_i32 = arith.constant 0 : i32
    %c0_i32_0 = arith.constant 0 : i32
    %c0_i32_1 = arith.constant 0 : i32
    return %c0_i32, %c0_i32_0 : i32, i32
  }
  func.func @transform_5(%arg0: i32) -> (i32, i32) {
    %c0_i32 = arith.constant 0 : i32
    %c0_i32_0 = arith.constant 0 : i32
    %c0_i32_1 = arith.constant 0 : i32
    return %c0_i32, %c0_i32_0 : i32, i32
  }
  func.func @transform_6(%arg0: i32) -> (i32, i32) {
    %c0_i32 = arith.constant 0 : i32
    %c0_i32_0 = arith.constant 0 : i32
    %c0_i32_1 = arith.constant 0 : i32
    return %c0_i32, %c0_i32_0 : i32, i32
  }
  func.func @transform_7(%arg0: i32) -> (i32, i32) {
    %c0_i32 = arith.constant 0 : i32
    %c0_i32_0 = arith.constant 0 : i32
    %c0_i32_1 = arith.constant 0 : i32
    return %c0_i32, %c0_i32_0 : i32, i32
  }
  func.func @transform_8(%arg0: i32) -> (i32, i32) {
    %c0_i32 = arith.constant 0 : i32
    %c0_i32_0 = arith.constant 0 : i32
    %c0_i32_1 = arith.constant 0 : i32
    return %c0_i32, %c0_i32_0 : i32, i32
  }
  func.func @transform_9(%arg0: i32) -> (i32, i32) {
    %c0_i32 = arith.constant 0 : i32
    %c0_i32_0 = arith.constant 0 : i32
    %c0_i32_1 = arith.constant 0 : i32
    return %c0_i32, %c0_i32_0 : i32, i32
  }
  func.func @transform_10(%arg0: i32) -> (i32, i32) {
    %c0_i32 = arith.constant 0 : i32
    %c0_i32_0 = arith.constant 0 : i32
    %c0_i32_1 = arith.constant 0 : i32
    return %c0_i32, %c0_i32_0 : i32, i32
  }
  func.func @transform_11(%arg0: i32) -> (i32, i32) {
    %c0_i32 = arith.constant 0 : i32
    %c0_i32_0 = arith.constant 0 : i32
    return %arg0, %c0_i32 : i32, i32
  }
}

</mosaic_0001>

<llo_original>
// kernel: tile.13
$region0: #{tile.13}
  #allocation0 [shape = 's32[1]{0}', space=sflag, size = 0x4, scoped, tag = 'scoped memory for tile.13']
  %s0 = inlined_call_operand.vmem [shape: f32[32], index: 0, kind: input, shape index: {}]
  %s1 = inlined_call_operand.vmem [shape: f32[16,32], index: 1, kind: output, shape index: {}]
  // Predicated region
  $region2: #{tile.13} parent=0 // pred_check
    _
  $region3: #{tile.13} parent=0 // pred_check_branch
    %3 = sbr.rel (0) target = $region5
  $region4: #{tile.13} parent=0 // pred_region
    _
  $region5: #{tile.13} parent=0 // pred_fallthru
    _
  %v4 = vld [vmem:[%s0] ss:$0 sm:$0xff]
  %5 = vst [vmem:[%s1] sm:$0xff] %v4
  %s6 = scalar_lea.vmem %s1, 8
  %7 = vst [vmem:[%s6] sm:$0xff] %v4

// kernel: simclr_forward.1
$region0: #{simclr_forward.1}
  #allocation0 [shape = 'u32[]', space=smem, size = 0x4, offset = 0x4, fixed_abs, tag = 'smem constant byte address 0x4 - core index']
  #allocation1 [shape = 'u32[72,128]{1,0:T(1,128)}', space=vmem, size = 0x9000, scoped, tag = 'internal scratch']
  %s0 = inlined_call_operand.vmem [shape: f32[3,256,128], index: 0, kind: input, shape index: {}]
  %s1 = inlined_call_operand.vmem [shape: f32[3,128,512], index: 1, kind: input, shape index: {}]
  %s2 = inlined_call_operand.vmem [shape: f32[1,512], index: 2, kind: input, shape index: {}]
  %s3 = inlined_call_operand.vmem [shape: f32[512,128], index: 3, kind: input, shape index: {}]
  %s4 = inlined_call_operand.vmem [shape: f32[8,128], index: 4, kind: input, shape index: {}]
  %s5 = inlined_call_operand.vmem [shape: f32[128,128], index: 5, kind: input, shape index: {}]
  %s6 = inlined_call_operand.vmem [shape: f32[1,128], index: 6, kind: input, shape index: {}]
  %s7 = inlined_call_operand.vmem [shape: f32[128,128], index: 7, kind: input, shape index: {}]
  %s8 = inlined_call_operand.vmem [shape: f32[1,128], index: 8, kind: input, shape index: {}]
  %s9 = inlined_call_operand.vmem [shape: f32[128,128], index: 9, kind: input, shape index: {}]
  %s10 = inlined_call_operand.vmem [shape: f32[1,128], index: 10, kind: input, shape index: {}]
  %s11 = inlined_call_operand.vmem [shape: f32[16,384], index: 11, kind: output, shape index: {}]
  %s12 = sld [smem:[#allocation0]]
  $region115: #{simclr_forward.1} parent=0
    _
  %s14 = ssub.s32 1, %s12
  %s15 = scalar_select 0, %s14, %s12
  $region1: #{simclr_forward.1} parent=0
    #allocation2 [shape = 'u8[393216]{0}', space=vmem, size = 0x60000, scoped, tag = 'input window, operand 0']
    loop: start=0, step=1, limit=4
    $region2: #{simclr_forward.1} parent=1 // loop_pre_header
      _
    $region3: #{simclr_forward.1} parent=1 // loop_header
      %s17 = sphi 0, %s21
      %p18 = scmp.ge.s32.totalorder %s17, 4
      %s27 = sphi 0, %s29
      %s30 = sphi 0, %s27
      %s31 = sphi 0, %s30
      %s47 = sphi 0, %s31
      %s51 = sphi 0, %s51
      %s53 = sphi 0, %s51
      %s54 = sphi 0, %s53
      %s68 = sphi 0, %s54
      %s72 = sphi 0, %s72
      %s74 = sphi 0, %s72
      %s75 = sphi 0, %s74
      %s89 = sphi 0, %s75
      %s93 = sphi 0, %s93
      %s95 = sphi 0, %s93
      %s96 = sphi 0, %s95
      %s110 = sphi 0, %s96
      %s114 = sphi 0, %s114
      %s116 = sphi 0, %s114
      %s117 = sphi 0, %s116
      %s131 = sphi 0, %s117
      %s135 = sphi 0, %s135
      %s137 = sphi 0, %s135
      %s138 = sphi 0, %s137
      %s152 = sphi 0, %s138
      %s156 = sphi 0, %s156
      %s158 = sphi 0, %s156
      %s159 = sphi 0, %s158
      %s173 = sphi 0, %s159
      %s177 = sphi 0, %s177
      %s179 = sphi 0, %s177
      %s180 = sphi 0, %s179
      %s194 = sphi 0, %s180
      %s198 = sphi 0, %s198
      %s200 = sphi 0, %s198
      %s201 = sphi 0, %s200
      %s215 = sphi 0, %s201
      %s219 = sphi 0, %s219
      %s221 = sphi 0, %s219
      %s222 = sphi 0, %s221
      %s236 = sphi 0, %s222
      %s240 = sphi 0, %s240
      %s242 = sphi 0, %s240
      %s243 = sphi 0, %s242
      %s257 = sphi 0, %s243
      %s263 = sphi 0, %s265
      %s266 = sphi 0, %s263
      %s267 = sphi 0, %s266
      %s283 = sphi 0, %s267
    $region4: #{simclr_forward.1} parent=1 // loop_header_branch
      %20 = sbr.rel (%p18) target = $region8
    $region5: #{simclr_forward.1} parent=1 // loop_body
      %s22 = ssub.s32 %s17, 1
      %s23 = ssub.s32 %s17, 2
      %s24 = sadd.s32 %s17, 1
      %s25 = ssub.s32 %s17, %s24
      %p26 = scmp.eq.s32.totalorder %s25, 0
      %s28 = sadd.s32 %s27, 1
      %s29 = scalar_select %p26, %s27, %s28
      %p32 = pneg %p26
      %p33 = scmp.eq.s32.totalorder %s17, 1
      %p34 = por %p32, %p33
      %p35 = scmp.ne.s32.totalorder %s27, %s30
      %p36 = scmp.eq.s32.totalorder %s17, 0
      %p37 = por %p35, %p36
      %p38 = scmp.ne.s32.totalorder %s27, %s30
      %p39 = scmp.eq.s32.totalorder %s22, 1
      %p40 = por %p38, %p39
      %p41 = scmp.ne.s32.totalorder %s30, %s31
      %p42 = scmp.eq.s32.totalorder %s22, 0
      %p43 = por %p41, %p42
      %p44 = scmp.ne.s32.totalorder %s30, %s31
      %p45 = scmp.eq.s32.totalorder %s23, 1
      %p46 = por %p44, %p45
      %p48 = scmp.ne.s32.totalorder %s31, %s47
      %p49 = scmp.eq.s32.totalorder %s23, 0
      %p50 = por %p48, %p49
      %s52 = sadd.s32 %s51, 1
      %p55 = scmp.eq.s32.totalorder %s17, 1
      %p56 = scmp.ne.s32.totalorder %s51, %s53
      %p57 = scmp.eq.s32.totalorder %s17, 0
      %p58 = por %p56, %p57
      %p59 = scmp.ne.s32.totalorder %s51, %s53
      %p60 = scmp.eq.s32.totalorder %s22, 1
      %p61 = por %p59, %p60
      %p62 = scmp.ne.s32.totalorder %s53, %s54
      %p63 = scmp.eq.s32.totalorder %s22, 0
      %p64 = por %p62, %p63
      %p65 = scmp.ne.s32.totalorder %s53, %s54
      %p66 = scmp.eq.s32.totalorder %s23, 1
      %p67 = por %p65, %p66
      %p69 = scmp.ne.s32.totalorder %s54, %s68
      %p70 = scmp.eq.s32.totalorder %s23, 0
      %p71 = por %p69, %p70
      %s73 = sadd.s32 %s72, 1
      %p76 = scmp.eq.s32.totalorder %s17, 1
      %p77 = scmp.ne.s32.totalorder %s72, %s74
      %p78 = scmp.eq.s32.totalorder %s17, 0
      %p79 = por %p77, %p78
      %p80 = scmp.ne.s32.totalorder %s72, %s74
      %p81 = scmp.eq.s32.totalorder %s22, 1
      %p82 = por %p80, %p81
      %p83 = scmp.ne.s32.totalorder %s74, %s75
      %p84 = scmp.eq.s32.totalorder %s22, 0
      %p85 = por %p83, %p84
      %p86 = scmp.ne.s32.totalorder %s74, %s75
      %p87 = scmp.eq.s32.totalorder %s23, 1
      %p88 = por %p86, %p87
      %p90 = scmp.ne.s32.totalorder %s75, %s89
      %p91 = scmp.eq.s32.totalorder %s23, 0
      %p92 = por %p90, %p91
      %s94 = sadd.s32 %s93, 1
      %p97 = scmp.eq.s32.totalorder %s17, 1
      %p98 = scmp.ne.s32.totalorder %s93, %s95
      %p99 = scmp.eq.s32.totalorder %s17, 0
      %p100 = por %p98, %p99
      %p101 = scmp.ne.s32.totalorder %s93, %s95
      %p102 = scmp.eq.s32.totalorder %s22, 1
      %p103 = por %p101, %p102
      %p104 = scmp.ne.s32.totalorder %s95, %s96
      %p105 = scmp.eq.s32.totalorder %s22, 0
      %p106 = por %p104, %p105
      %p107 = scmp.ne.s32.totalorder %s95, %s96
      %p108 = scmp.eq.s32.totalorder %s23, 1
      %p109 = por %p107, %p108
      %p111 = scmp.ne.s32.totalorder %s96, %s110
      %p112 = scmp.eq.s32.totalorder %s23, 0
      %p113 = por %p111, %p112
      %s115 = sadd.s32 %s114, 1
      %p118 = scmp.eq.s32.totalorder %s17, 1
      %p119 = scmp.ne.s32.totalorder %s114, %s116
      %p120 = scmp.eq.s32.totalorder %s17, 0
      %p121 = por %p119, %p120
      %p122 = scmp.ne.s32.totalorder %s114, %s116
      %p123 = scmp.eq.s32.totalorder %s22, 1
      %p124 = por %p122, %p123
      %p125 = scmp.ne.s32.totalorder %s116, %s117
      %p126 = scmp.eq.s32.totalorder %s22, 0
      %p127 = por %p125, %p126
      %p128 = scmp.ne.s32.totalorder %s116, %s117
      %p129 = scmp.eq.s32.totalorder %s23, 1
      %p130 = por %p128, %p129
      %p132 = scmp.ne.s32.totalorder %s117, %s131
      %p133 = scmp.eq.s32.totalorder %s23, 0
      %p134 = por %p132, %p133
      %s136 = sadd.s32 %s135, 1
      %p139 = scmp.eq.s32.totalorder %s17, 1
      %p140 = scmp.ne.s32.totalorder %s135, %s137
      %p141 = scmp.eq.s32.totalorder %s17, 0
      %p142 = por %p140, %p141
      %p143 = scmp.ne.s32.totalorder %s135, %s137
      %p144 = scmp.eq.s32.totalorder %s22, 1
      %p145 = por %p143, %p144
      %p146 = scmp.ne.s32.totalorder %s137, %s138
      %p147 = scmp.eq.s32.totalorder %s22, 0
      %p148 = por %p146, %p147
      %p149 = scmp.ne.s32.totalorder %s137, %s138
      %p150 = scmp.eq.s32.totalorder %s23, 1
      %p151 = por %p149, %p150
      %p153 = scmp.ne.s32.totalorder %s138, %s152
      %p154 = scmp.eq.s32.totalorder %s23, 0
      %p155 = por %p153, %p154
      %s157 = sadd.s32 %s156, 1
      %p160 = scmp.eq.s32.totalorder %s17, 1
      %p161 = scmp.ne.s32.totalorder %s156, %s158
      %p162 = scmp.eq.s32.totalorder %s17, 0
      %p163 = por %p161, %p162
      %p164 = scmp.ne.s32.totalorder %s156, %s158
      %p165 = scmp.eq.s32.totalorder %s22, 1
      %p166 = por %p164, %p165
      %p167 = scmp.ne.s32.totalorder %s158, %s159
      %p168 = scmp.eq.s32.totalorder %s22, 0
      %p169 = por %p167, %p168
      %p170 = scmp.ne.s32.totalorder %s158, %s159
      %p171 = scmp.eq.s32.totalorder %s23, 1
      %p172 = por %p170, %p171
      %p174 = scmp.ne.s32.totalorder %s159, %s173
      %p175 = scmp.eq.s32.totalorder %s23, 0
      %p176 = por %p174, %p175
      %s178 = sadd.s32 %s177, 1
      %p181 = scmp.eq.s32.totalorder %s17, 1
      %p182 = scmp.ne.s32.totalorder %s177, %s179
      %p183 = scmp.eq.s32.totalorder %s17, 0
      %p184 = por %p182, %p183
      %p185 = scmp.ne.s32.totalorder %s177, %s179
      %p186 = scmp.eq.s32.totalorder %s22, 1
      %p187 = por %p185, %p186
      %p188 = scmp.ne.s32.totalorder %s179, %s180
      %p189 = scmp.eq.s32.totalorder %s22, 0
      %p190 = por %p188, %p189
      %p191 = scmp.ne.s32.totalorder %s179, %s180
      %p192 = scmp.eq.s32.totalorder %s23, 1
      %p193 = por %p191, %p192
      %p195 = scmp.ne.s32.totalorder %s180, %s194
      %p196 = scmp.eq.s32.totalorder %s23, 0
      %p197 = por %p195, %p196
      %s199 = sadd.s32 %s198, 1
      %p202 = scmp.eq.s32.totalorder %s17, 1
      %p203 = scmp.ne.s32.totalorder %s198, %s200
      %p204 = scmp.eq.s32.totalorder %s17, 0
      %p205 = por %p203, %p204
      %p206 = scmp.ne.s32.totalorder %s198, %s200
      %p207 = scmp.eq.s32.totalorder %s22, 1
      %p208 = por %p206, %p207
      %p209 = scmp.ne.s32.totalorder %s200, %s201
      %p210 = scmp.eq.s32.totalorder %s22, 0
      %p211 = por %p209, %p210
      %p212 = scmp.ne.s32.totalorder %s200, %s201
      %p213 = scmp.eq.s32.totalorder %s23, 1
      %p214 = por %p212, %p213
      %p216 = scmp.ne.s32.totalorder %s201, %s215
      %p217 = scmp.eq.s32.totalorder %s23, 0
      %p218 = por %p216, %p217
      %s220 = sadd.s32 %s219, 1
      %p223 = scmp.eq.s32.totalorder %s17, 1
      %p224 = scmp.ne.s32.totalorder %s219, %s221
      %p225 = scmp.eq.s32.totalorder %s17, 0
      %p226 = por %p224, %p225
      %p227 = scmp.ne.s32.totalorder %s219, %s221
      %p228 = scmp.eq.s32.totalorder %s22, 1
      %p229 = por %p227, %p228
      %p230 = scmp.ne.s32.totalorder %s221, %s222
      %p231 = scmp.eq.s32.totalorder %s22, 0
      %p232 = por %p230, %p231
      %p233 = scmp.ne.s32.totalorder %s221, %s222
      %p234 = scmp.eq.s32.totalorder %s23, 1
      %p235 = por %p233, %p234
      %p237 = scmp.ne.s32.totalorder %s222, %s236
      %p238 = scmp.eq.s32.totalorder %s23, 0
      %p239 = por %p237, %p238
      %s241 = sadd.s32 %s240, 1
      %p244 = scmp.eq.s32.totalorder %s17, 1
      %p245 = scmp.ne.s32.totalorder %s240, %s242
      %p246 = scmp.eq.s32.totalorder %s17, 0
      %p247 = por %p245, %p246
      %p248 = scmp.ne.s32.totalorder %s240, %s242
      %p249 = scmp.eq.s32.totalorder %s22, 1
      %p250 = por %p248, %p249
      %p251 = scmp.ne.s32.totalorder %s242, %s243
      %p252 = scmp.eq.s32.totalorder %s22, 0
      %p253 = por %p251, %p252
      %p254 = scmp.ne.s32.totalorder %s242, %s243
      %p255 = scmp.eq.s32.totalorder %s23, 1
      %p256 = por %p254, %p255
      %p258 = scmp.ne.s32.totalorder %s243, %s257
      %p259 = scmp.eq.s32.totalorder %s23, 0
      %p260 = por %p258, %p259
      %s261 = ssub.s32 %s17, %s24
      %p262 = scmp.eq.s32.totalorder %s261, 0
      %s264 = sadd.s32 %s263, 1
      %s265 = scalar_select %p262, %s263, %s264
      %p268 = pneg %p262
      %p269 = scmp.eq.s32.totalorder %s17, 1
      %p270 = por %p268, %p269
      %p271 = scmp.ne.s32.totalorder %s263, %s266
      %p272 = scmp.eq.s32.totalorder %s17, 0
      %p273 = por %p271, %p272
      %p274 = scmp.ne.s32.totalorder %s263, %s266
      %p275 = scmp.eq.s32.totalorder %s22, 1
      %p276 = por %p274, %p275
      %p277 = scmp.ne.s32.totalorder %s266, %s267
      %p278 = scmp.eq.s32.totalorder %s22, 0
      %p279 = por %p277, %p278
      %p280 = scmp.ne.s32.totalorder %s266, %s267
      %p281 = scmp.eq.s32.totalorder %s23, 1
      %p282 = por %p280, %p281
      %p284 = scmp.ne.s32.totalorder %s267, %s283
      %p285 = scmp.eq.s32.totalorder %s23, 0
      %p286 = por %p284, %p285
      %p287 = scmp.le.s32.totalorder 1, %s17
      %p288 = scmp.lt.s32.totalorder %s17, 3
      %p289 = pnand %p287, %p288
      %p290 = pneg %p289
      // Predicated region
      $region9: #{simclr_forward.1} parent=5 // pred_check
        _
      $region10: #{simclr_forward.1} parent=5 // pred_check_branch
        %292 = sbr.rel (%p289) target = $region12
      $region11: #{simclr_forward.1} parent=5 // pred_region
        %s293 = ssub.s32 %s17, 1
        // Predicated region
        $region13: #{simclr_forward.1} parent=11 // pred_check
          %p294 = pneg %p64
        $region14: #{simclr_forward.1} parent=11 // pred_check_branch
          %296 = sbr.rel (%p294) target = $region16
        $region15: #{simclr_forward.1} parent=11 // pred_region
          _
        $region16: #{simclr_forward.1} parent=11 // pred_fallthru
          _
        // Predicated region
        $region17: #{simclr_forward.1} parent=11 // pred_check
          %p297 = pneg %p85
        $region18: #{simclr_forward.1} parent=11 // pred_check_branch
          %299 = sbr.rel (%p297) target = $region20
        $region19: #{simclr_forward.1} parent=11 // pred_region
          _
        $region20: #{simclr_forward.1} parent=11 // pred_fallthru
          _
        // Predicated region
        $region21: #{simclr_forward.1} parent=11 // pred_check
          %p300 = pneg %p106
        $region22: #{simclr_forward.1} parent=11 // pred_check_branch
          %302 = sbr.rel (%p300) target = $region24
        $region23: #{simclr_forward.1} parent=11 // pred_region
          _
        $region24: #{simclr_forward.1} parent=11 // pred_fallthru
          _
        // Predicated region
        $region25: #{simclr_forward.1} parent=11 // pred_check
          %p303 = pneg %p127
        $region26: #{simclr_forward.1} parent=11 // pred_check_branch
          %305 = sbr.rel (%p303) target = $region28
        $region27: #{simclr_forward.1} parent=11 // pred_region
          _
        $region28: #{simclr_forward.1} parent=11 // pred_fallthru
          _
        // Predicated region
        $region29: #{simclr_forward.1} parent=11 // pred_check
          %p306 = pneg %p148
        $region30: #{simclr_forward.1} parent=11 // pred_check_branch
          %308 = sbr.rel (%p306) target = $region32
        $region31: #{simclr_forward.1} parent=11 // pred_region
          _
        $region32: #{simclr_forward.1} parent=11 // pred_fallthru
          _
        // Predicated region
        $region33: #{simclr_forward.1} parent=11 // pred_check
          %p309 = pneg %p169
        $region34: #{simclr_forward.1} parent=11 // pred_check_branch
          %311 = sbr.rel (%p309) target = $region36
        $region35: #{simclr_forward.1} parent=11 // pred_region
          _
        $region36: #{simclr_forward.1} parent=11 // pred_fallthru
          _
        // Predicated region
        $region37: #{simclr_forward.1} parent=11 // pred_check
          %p312 = pneg %p190
        $region38: #{simclr_forward.1} parent=11 // pred_check_branch
          %314 = sbr.rel (%p312) target = $region40
        $region39: #{simclr_forward.1} parent=11 // pred_region
          _
        $region40: #{simclr_forward.1} parent=11 // pred_fallthru
          _
        // Predicated region
        $region41: #{simclr_forward.1} parent=11 // pred_check
          %p315 = pneg %p211
        $region42: #{simclr_forward.1} parent=11 // pred_check_branch
          %317 = sbr.rel (%p315) target = $region44
        $region43: #{simclr_forward.1} parent=11 // pred_region
          _
        $region44: #{simclr_forward.1} parent=11 // pred_fallthru
          _
        // Predicated region
        $region45: #{simclr_forward.1} parent=11 // pred_check
          %p318 = pneg %p232
        $region46: #{simclr_forward.1} parent=11 // pred_check_branch
          %320 = sbr.rel (%p318) target = $region48
        $region47: #{simclr_forward.1} parent=11 // pred_region
          _
        $region48: #{simclr_forward.1} parent=11 // pred_fallthru
          _
        // Predicated region
        $region49: #{simclr_forward.1} parent=11 // pred_check
          %p321 = pneg %p253
        $region50: #{simclr_forward.1} parent=11 // pred_check_branch
          %323 = sbr.rel (%p321) target = $region52
        $region51: #{simclr_forward.1} parent=11 // pred_region
          _
        $region52: #{simclr_forward.1} parent=11 // pred_fallthru
          _
      $region12: #{simclr_forward.1} parent=5 // pred_fallthru
        _
      %p324 = scmp.lt.s32.totalorder %s17, 2
      // Predicated region
      $region53: #{simclr_forward.1} parent=5 // pred_check
        %p325 = pneg %p324
      $region54: #{simclr_forward.1} parent=5 // pred_check_branch
        %327 = sbr.rel (%p325) target = $region56
      $region55: #{simclr_forward.1} parent=5 // pred_region
        // Predicated region
        $region57: #{simclr_forward.1} parent=55 // pred_check
          %p328 = pneg %p37
        $region58: #{simclr_forward.1} parent=55 // pred_check_branch
          %330 = sbr.rel (%p328) target = $region60
        $region59: #{simclr_forward.1} parent=55 // pred_region
          %s331 = sand.u32 %s27, 1
          %s332 = sand.u32 %s27, 1
          %s333 = smul.addr %s332, 384
          %s334 = scalar_lea.vmem [#allocation2], %s333
          %s335 = smul.u32 16, %s17
          %s336 = smul.addr %s335, 8
          %s337 = scalar_lea.vmem %s0, %s336
          // Predicated region
          $region61: #{simclr_forward.1} parent=59 // pred_check
            _
          $region62: #{simclr_forward.1} parent=59 // pred_check_branch
            %339 = sbr.rel (0) target = $region64
          $region63: #{simclr_forward.1} parent=59 // pred_region
            // Predicated region
            $region65: #{simclr_forward.1} parent=63 // pred_check
              _
            $region66: #{simclr_forward.1} parent=63 // pred_check_branch
              %341 = sbr.rel (0) target = $region68
            $region67: #{simclr_forward.1} parent=63 // pred_region
              // Predicated region
              $region80: #{simclr_forward.1} parent=67 // pred_check
                _
              $region81: #{simclr_forward.1} parent=67 // pred_check_branch
                %451 = sbr.rel (0) target = $region83
              $region82: #{simclr_forward.1} parent=67 // pred_region
                loop: start=0, step=1, limit=1
                $region84: #{simclr_forward.1} parent=82 // loop_pre_header
                  _
                $region85: #{simclr_forward.1} parent=82 // loop_header
                  %s453 = sphi 0, %s457
                  %p454 = scmp.ge.s32.totalorder %s453, 1
                  %s458 = sphi %s337, %s337
                  %s459 = sphi %s334, %s334
                $region86: #{simclr_forward.1} parent=82 // loop_header_branch
                  %456 = sbr.rel (%p454) target = $region90
                $region87: #{simclr_forward.1} parent=82 // loop_body
                  %v460 = vld [vmem:[%s458] sm:$0xff]
                  %461 = vst [vmem:[%s459] sm:$0xff] %v460
                  %v462 = vld [vmem:[%s458 + $0x8] sm:$0xff]
                  %463 = vst [vmem:[%s459 + $0x8] sm:$0xff] %v462
                  %v464 = vld [vmem:[%s458 + $0x10] sm:$0xff]
                  %465 = vst [vmem:[%s459 + $0x10] sm:$0xff] %v464
                  %v466 = vld [vmem:[%s458 + $0x18] sm:$0xff]
                  %467 = vst [vmem:[%s459 + $0x18] sm:$0xff] %v466
                  %v468 = vld [vmem:[%s458 + $0x20] sm:$0xff]
                  %469 = vst [vmem:[%s459 + $0x20] sm:$0xff] %v468
                  %v470 = vld [vmem:[%s458 + $0x28] sm:$0xff]
                  %471 = vst [vmem:[%s459 + $0x28] sm:$0xff] %v470
                  %v472 = vld [vmem:[%s458 + $0x30] sm:$0xff]
                  %473 = vst [vmem:[%s459 + $0x30] sm:$0xff] %v472
                  %v474 = vld [vmem:[%s458 + $0x38] sm:$0xff]
                  %475 = vst [vmem:[%s459 + $0x38] sm:$0xff] %v474
                  %v476 = vld [vmem:[%s458 + $0x40] sm:$0xff]
                  %477 = vst [vmem:[%s459 + $0x40] sm:$0xff] %v476
                  %v478 = vld [vmem:[%s458 + $0x48] sm:$0xff]
                  %479 = vst [vmem:[%s459 + $0x48] sm:$0xff] %v478
                  %v480 = vld [vmem:[%s458 + $0x50] sm:$0xff]
                  %481 = vst [vmem:[%s459 + $0x50] sm:$0xff] %v480
                  %v482 = vld [vmem:[%s458 + $0x58] sm:$0xff]
                  %483 = vst [vmem:[%s459 + $0x58] sm:$0xff] %v482
                  %v484 = vld [vmem:[%s458 + $0x60] sm:$0xff]
                  %485 = vst [vmem:[%s459 + $0x60] sm:$0xff] %v484
                  %v486 = vld [vmem:[%s458 + $0x68] sm:$0xff]
                  %487 = vst [vmem:[%s459 + $0x68] sm:$0xff] %v486
                  %v488 = vld [vmem:[%s458 + $0x70] sm:$0xff]
                  %489 = vst [vmem:[%s459 + $0x70] sm:$0xff] %v488
                  %v490 = vld [vmem:[%s458 + $0x78] sm:$0xff]
                  %491 = vst [vmem:[%s459 + $0x78] sm:$0xff] %v490
                  %v492 = vld [vmem:[%s458 + $0x100] sm:$0xff]
                  %493 = vst [vmem:[%s459 + $0x80] sm:$0xff] %v492
                  %v494 = vld [vmem:[%s458 + $0x108] sm:$0xff]
                  %495 = vst [vmem:[%s459 + $0x88] sm:$0xff] %v494
                  %v496 = vld [vmem:[%s458 + $0x110] sm:$0xff]
                  %497 = vst [vmem:[%s459 + $0x90] sm:$0xff] %v496
                  %v498 = vld [vmem:[%s458 + $0x118] sm:$0xff]
                  %499 = vst [vmem:[%s459 + $0x98] sm:$0xff] %v498
                  %v500 = vld [vmem:[%s458 + $0x120] sm:$0xff]
                  %501 = vst [vmem:[%s459 + $0xa0] sm:$0xff] %v500
                  %v502 = vld [vmem:[%s458 + $0x128] sm:$0xff]
                  %503 = vst [vmem:[%s459 + $0xa8] sm:$0xff] %v502
                  %v504 = vld [vmem:[%s458 + $0x130] sm:$0xff]
                  %505 = vst [vmem:[%s459 + $0xb0] sm:$0xff] %v504
                  %v506 = vld [vmem:[%s458 + $0x138] sm:$0xff]
                  %507 = vst [vmem:[%s459 + $0xb8] sm:$0xff] %v506
                  %v508 = vld [vmem:[%s458 + $0x140] sm:$0xff]
                  %509 = vst [vmem:[%s459 + $0xc0] sm:$0xff] %v508
                  %v510 = vld [vmem:[%s458 + $0x148] sm:$0xff]
                  %511 = vst [vmem:[%s459 + $0xc8] sm:$0xff] %v510
                  %v512 = vld [vmem:[%s458 + $0x150] sm:$0xff]
                  %513 = vst [vmem:[%s459 + $0xd0] sm:$0xff] %v512
                  %v514 = vld [vmem:[%s458 + $0x158] sm:$0xff]
                  %515 = vst [vmem:[%s459 + $0xd8] sm:$0xff] %v514
                  %v516 = vld [vmem:[%s458 + $0x160] sm:$0xff]
                  %517 = vst [vmem:[%s459 + $0xe0] sm:$0xff] %v516
                  %v518 = vld [vmem:[%s458 + $0x168] sm:$0xff]
                  %519 = vst [vmem:[%s459 + $0xe8] sm:$0xff] %v518
                  %v520 = vld [vmem:[%s458 + $0x170] sm:$0xff]
                  %521 = vst [vmem:[%s459 + $0xf0] sm:$0xff] %v520
                  %v522 = vld [vmem:[%s458 + $0x178] sm:$0xff]
                  %523 = vst [vmem:[%s459 + $0xf8] sm:$0xff] %v522
                  %v524 = vld [vmem:[%s458 + $0x200] sm:$0xff]
                  %525 = vst [vmem:[%s459 + $0x100] sm:$0xff] %v524
                  %v526 = vld [vmem:[%s458 + $0x208] sm:$0xff]
                  %527 = vst [vmem:[%s459 + $0x108] sm:$0xff] %v526
                  %v528 = vld [vmem:[%s458 + $0x210] sm:$0xff]
                  %529 = vst [vmem:[%s459 + $0x110] sm:$0xff] %v528
                  %v530 = vld [vmem:[%s458 + $0x218] sm:$0xff]
                  %531 = vst [vmem:[%s459 + $0x118] sm:$0xff] %v530
                  %v532 = vld [vmem:[%s458 + $0x220] sm:$0xff]
                  %533 = vst [vmem:[%s459 + $0x120] sm:$0xff] %v532
                  %v534 = vld [vmem:[%s458 + $0x228] sm:$0xff]
                  %535 = vst [vmem:[%s459 + $0x128] sm:$0xff] %v534
                  %v536 = vld [vmem:[%s458 + $0x230] sm:$0xff]
                  %537 = vst [vmem:[%s459 + $0x130] sm:$0xff] %v536
                  %v538 = vld [vmem:[%s458 + $0x238] sm:$0xff]
                  %539 = vst [vmem:[%s459 + $0x138] sm:$0xff] %v538
                  %v540 = vld [vmem:[%s458 + $0x240] sm:$0xff]
                  %541 = vst [vmem:[%s459 + $0x140] sm:$0xff] %v540
                  %v542 = vld [vmem:[%s458 + $0x248] sm:$0xff]
                  %543 = vst [vmem:[%s459 + $0x148] sm:$0xff] %v542
                  %v544 = vld [vmem:[%s458 + $0x250] sm:$0xff]
                  %545 = vst [vmem:[%s459 + $0x150] sm:$0xff] %v544
                  %v546 = vld [vmem:[%s458 + $0x258] sm:$0xff]
                  %547 = vst [vmem:[%s459 + $0x158] sm:$0xff] %v546
                  %v548 = vld [vmem:[%s458 + $0x260] sm:$0xff]
                  %549 = vst [vmem:[%s459 + $0x160] sm:$0xff] %v548
                  %v550 = vld [vmem:[%s458 + $0x268] sm:$0xff]
                  %551 = vst [vmem:[%s459 + $0x168] sm:$0xff] %v550
                  %v552 = vld [vmem:[%s458 + $0x270] sm:$0xff]
                  %553 = vst [vmem:[%s459 + $0x170] sm:$0xff] %v552
                  %v554 = vld [vmem:[%s458 + $0x278] sm:$0xff]
                  %555 = vst [vmem:[%s459 + $0x178] sm:$0xff] %v554
                $region88: #{simclr_forward.1} parent=82 // loop_footer
                  %s457 = sadd.s32 1, %s453
                $region89: #{simclr_forward.1} parent=82 // loop_footer_branch
                  %452 = sbr.rel target = $region85
                $region90: #{simclr_forward.1} parent=82 // loop_exit
                  _
              $region83: #{simclr_forward.1} parent=67 // pred_fallthru
                _
              // Predicated region
              $region91: #{simclr_forward.1} parent=67 // pred_check
                _
              $region92: #{simclr_forward.1} parent=67 // pred_check_branch
                %557 = sbr.rel target = $region94
              $region93: #{simclr_forward.1} parent=67 // pred_region
                _
              $region94: #{simclr_forward.1} parent=67 // pred_fallthru
                _
            $region68: #{simclr_forward.1} parent=63 // pred_fallthru
              _
            // Predicated region
            $region69: #{simclr_forward.1} parent=63 // pred_check
              _
            $region70: #{simclr_forward.1} parent=63 // pred_check_branch
              %343 = sbr.rel target = $region72
            $region71: #{simclr_forward.1} parent=63 // pred_region
              %s345 = ssub.s32 256, 1
              loop: start=0, step=1, limit=1
              $region73: #{simclr_forward.1} parent=71 // loop_pre_header
                _
              $region74: #{simclr_forward.1} parent=71 // loop_header
                %s347 = sphi 0, %s351
                %p348 = scmp.ge.s32.totalorder %s347, 1
                %s352 = sphi %s337, %s337
                %s353 = sphi %s334, %s334
              $region75: #{simclr_forward.1} parent=71 // loop_header_branch
                %350 = sbr.rel (%p348) target = $region79
              $region76: #{simclr_forward.1} parent=71 // loop_body
                %v354 = vld [vmem:[%s352] sm:%s345]
                %355 = vst [vmem:[%s353] sm:%s345] %v354
                %v356 = vld [vmem:[%s352 + $0x8] sm:%s345]
                %357 = vst [vmem:[%s353 + $0x8] sm:%s345] %v356
                %v358 = vld [vmem:[%s352 + $0x10] sm:%s345]
                %359 = vst [vmem:[%s353 + $0x10] sm:%s345] %v358
                %v360 = vld [vmem:[%s352 + $0x18] sm:%s345]
                %361 = vst [vmem:[%s353 + $0x18] sm:%s345] %v360
                %v362 = vld [vmem:[%s352 + $0x20] sm:%s345]
                %363 = vst [vmem:[%s353 + $0x20] sm:%s345] %v362
                %v364 = vld [vmem:[%s352 + $0x28] sm:%s345]
                %365 = vst [vmem:[%s353 + $0x28] sm:%s345] %v364
                %v366 = vld [vmem:[%s352 + $0x30] sm:%s345]
                %367 = vst [vmem:[%s353 + $0x30] sm:%s345] %v366
                %v368 = vld [vmem:[%s352 + $0x38] sm:%s345]
                %369 = vst [vmem:[%s353 + $0x38] sm:%s345] %v368
                %v370 = vld [vmem:[%s352 + $0x40] sm:%s345]
                %371 = vst [vmem:[%s353 + $0x40] sm:%s345] %v370
                %v372 = vld [vmem:[%s352 + $0x48] sm:%s345]
                %373 = vst [vmem:[%s353 + $0x48] sm:%s345] %v372
                %v374 = vld [vmem:[%s352 + $0x50] sm:%s345]
                %375 = vst [vmem:[%s353 + $0x50] sm:%s345] %v374
                %v376 = vld [vmem:[%s352 + $0x58] sm:%s345]
                %377 = vst [vmem:[%s353 + $0x58] sm:%s345] %v376
                %v378 = vld [vmem:[%s352 + $0x60] sm:%s345]
                %379 = vst [vmem:[%s353 + $0x60] sm:%s345] %v378
                %v380 = vld [vmem:[%s352 + $0x68] sm:%s345]
                %381 = vst [vmem:[%s353 + $0x68] sm:%s345] %v380
                %v382 = vld [vmem:[%s352 + $0x70] sm:%s345]
                %383 = vst [vmem:[%s353 + $0x70] sm:%s345] %v382
                %v384 = vld [vmem:[%s352 + $0x78] sm:%s345]
                %385 = vst [vmem:[%s353 + $0x78] sm:%s345] %v384
                %v386 = vld [vmem:[%s352 + $0x100] sm:%s345]
                %387 = vst [vmem:[%s353 + $0x80] sm:%s345] %v386
                %v388 = vld [vmem:[%s352 + $0x108] sm:%s345]
                %389 = vst [vmem:[%s353 + $0x88] sm:%s345] %v388
                %v390 = vld [vmem:[%s352 + $0x110] sm:%s345]
                %391 = vst [vmem:[%s353 + $0x90] sm:%s345] %v390
                %v392 = vld [vmem:[%s352 + $0x118] sm:%s345]
                %393 = vst [vmem:[%s353 + $0x98] sm:%s345] %v392
                %v394 = vld [vmem:[%s352 + $0x120] sm:%s345]
                %395 = vst [vmem:[%s353 + $0xa0] sm:%s345] %v394
                %v396 = vld [vmem:[%s352 + $0x128] sm:%s345]
                %397 = vst [vmem:[%s353 + $0xa8] sm:%s345] %v396
                %v398 = vld [vmem:[%s352 + $0x130] sm:%s345]
                %399 = vst [vmem:[%s353 + $0xb0] sm:%s345] %v398
                %v400 = vld [vmem:[%s352 + $0x138] sm:%s345]
                %401 = vst [vmem:[%s353 + $0xb8] sm:%s345] %v400
                %v402 = vld [vmem:[%s352 + $0x140] sm:%s345]
                %403 = vst [vmem:[%s353 + $0xc0] sm:%s345] %v402
                %v404 = vld [vmem:[%s352 + $0x148] sm:%s345]
                %405 = vst [vmem:[%s353 + $0xc8] sm:%s345] %v404
                %v406 = vld [vmem:[%s352 + $0x150] sm:%s345]
                %407 = vst [vmem:[%s353 + $0xd0] sm:%s345] %v406
                %v408 = vld [vmem:[%s352 + $0x158] sm:%s345]
                %409 = vst [vmem:[%s353 + $0xd8] sm:%s345] %v408
                %v410 = vld [vmem:[%s352 + $0x160] sm:%s345]
                %411 = vst [vmem:[%s353 + $0xe0] sm:%s345] %v410
                %v412 = vld [vmem:[%s352 + $0x168] sm:%s345]
                %413 = vst [vmem:[%s353 + $0xe8] sm:%s345] %v412
                %v414 = vld [vmem:[%s352 + $0x170] sm:%s345]
                %415 = vst [vmem:[%s353 + $0xf0] sm:%s345] %v414
                %v416 = vld [vmem:[%s352 + $0x178] sm:%s345]
                %417 = vst [vmem:[%s353 + $0xf8] sm:%s345] %v416
                %v418 = vld [vmem:[%s352 + $0x200] sm:%s345]
                %419 = vst [vmem:[%s353 + $0x100] sm:%s345] %v418
                %v420 = vld [vmem:[%s352 + $0x208] sm:%s345]
                %421 = vst [vmem:[%s353 + $0x108] sm:%s345] %v420
                %v422 = vld [vmem:[%s352 + $0x210] sm:%s345]
                %423 = vst [vmem:[%s353 + $0x110] sm:%s345] %v422
                %v424 = vld [vmem:[%s352 + $0x218] sm:%s345]
                %425 = vst [vmem:[%s353 + $0x118] sm:%s345] %v424
                %v426 = vld [vmem:[%s352 + $0x220] sm:%s345]
                %427 = vst [vmem:[%s353 + $0x120] sm:%s345] %v426
                %v428 = vld [vmem:[%s352 + $0x228] sm:%s345]
                %429 = vst [vmem:[%s353 + $0x128] sm:%s345] %v428
                %v430 = vld [vmem:[%s352 + $0x230] sm:%s345]
                %431 = vst [vmem:[%s353 + $0x130] sm:%s345] %v430
                %v432 = vld [vmem:[%s352 + $0x238] sm:%s345]
                %433 = vst [vmem:[%s353 + $0x138] sm:%s345] %v432
                %v434 = vld [vmem:[%s352 + $0x240] sm:%s345]
                %435 = vst [vmem:[%s353 + $0x140] sm:%s345] %v434
                %v436 = vld [vmem:[%s352 + $0x248] sm:%s345]
                %437 = vst [vmem:[%s353 + $0x148] sm:%s345] %v436
                %v438 = vld [vmem:[%s352 + $0x250] sm:%s345]
                %439 = vst [vmem:[%s353 + $0x150] sm:%s345] %v438
                %v440 = vld [vmem:[%s352 + $0x258] sm:%s345]
                %441 = vst [vmem:[%s353 + $0x158] sm:%s345] %v440
                %v442 = vld [vmem:[%s352 + $0x260] sm:%s345]
                %443 = vst [vmem:[%s353 + $0x160] sm:%s345] %v442
                %v444 = vld [vmem:[%s352 + $0x268] sm:%s345]
                %445 = vst [vmem:[%s353 + $0x168] sm:%s345] %v444
                %v446 = vld [vmem:[%s352 + $0x270] sm:%s345]
                %447 = vst [vmem:[%s353 + $0x170] sm:%s345] %v446
                %v448 = vld [vmem:[%s352 + $0x278] sm:%s345]
                %449 = vst [vmem:[%s353 + $0x178] sm:%s345] %v448
              $region77: #{simclr_forward.1} parent=71 // loop_footer
                %s351 = sadd.s32 1, %s347
              $region78: #{simclr_forward.1} parent=71 // loop_footer_branch
                %346 = sbr.rel target = $region74
              $region79: #{simclr_forward.1} parent=71 // loop_exit
                _
            $region72: #{simclr_forward.1} parent=63 // pred_fallthru
              _
          $region64: #{simclr_forward.1} parent=59 // pred_fallthru
            _
          %558 = vnop
        $region60: #{simclr_forward.1} parent=55 // pred_fallthru
          _
      $region56: #{simclr_forward.1} parent=5 // pred_fallthru
        _
      %p559 = scmp.le.s32.totalorder 1, %s17
      %p560 = scmp.lt.s32.totalorder %s17, 3
      %p561 = pnand %p559, %p560
      %p562 = pneg %p561
      // Predicated region
      $region95: #{simclr_forward.1} parent=5 // pred_check
        _
      $region96: #{simclr_forward.1} parent=5 // pred_check_branch
        %564 = sbr.rel (%p561) target = $region98
      $region97: #{simclr_forward.1} parent=5 // pred_region
        %s565 = ssub.s32 %s17, 1
        %s566 = sand.u32 %s30, 1
        %s567 = sand.u32 %s30, 1
        %s568 = smul.addr %s567, 384
        %s569 = scalar_lea.vmem [#allocation2], %s568
        // Predicated region
        $region99: #{simclr_forward.1} parent=97 // pred_check
          %p570 = pneg %p43
        $region100: #{simclr_forward.1} parent=97 // pred_check_branch
          %572 = sbr.rel (%p570) target = $region102
        $region101: #{simclr_forward.1} parent=97 // pred_region
          _
        $region102: #{simclr_forward.1} parent=97 // pred_fallthru
          _
        %s573 = sand.u32 %s30, 1
        %s574 = sand.u32 %s30, 1
        %s575 = smul.addr %s574, 384
        %s576 = scalar_lea.vmem [#allocation2], %s575
        %p577 = pneg %p43
        %p578 = pneg %p40
        %p579 = pneg %p64
        %p580 = pneg %p61
        %p581 = pneg %p85
        %p582 = pneg %p82
        %p583 = pneg %p106
        %p584 = pneg %p103
        %p585 = pneg %p127
        %p586 = pneg %p124
        %p587 = pneg %p148
        %p588 = pneg %p145
        %p589 = pneg %p169
        %p590 = pneg %p166
        %p591 = pneg %p190
        %p592 = pneg %p187
        %p593 = pneg %p211
        %p594 = pneg %p208
        %p595 = pneg %p232
        %p596 = pneg %p229
        %p597 = pneg %p253
        %p598 = pneg %p250
        %p599 = pneg %p279
        %p600 = pneg %p276
        %p601 = scmp.lt.s32.totalorder %s22, 1
        %s602 = scalar_select %p601, %s22, 1
        %s603 = smul.addr %s602, 3
        %s604 = smul.addr %s603, 8
        %s605 = scalar_lea.vmem %s11, %s604
        %s606 = smul.u32 16, %s22
        %p607 = scmp.lt.s32.totalorder %s22, 1
        %s608 = scalar_select %p607, %s22, 1
        %s609 = smul.addr %s608, 3
        %s610 = smul.addr %s609, 8
        %s611 = scalar_lea.vmem %s11, %s610
        %v612 = vld [vmem:[%s569] sm:$0xff]
        %v613 = vld [vmem:[%s569 + $0x8] sm:$0xff]
        %v614 = vld [vmem:[%s569 + $0x10] sm:$0xff]
        %v615 = vld [vmem:[%s569 + $0x18] sm:$0xff]
        %v616 = vld [vmem:[%s569 + $0x20] sm:$0xff]
        %v617 = vld [vmem:[%s569 + $0x28] sm:$0xff]
        %v618 = vld [vmem:[%s569 + $0x30] sm:$0xff]
        %v619 = vld [vmem:[%s569 + $0x38] sm:$0xff]
        %v620 = vld [vmem:[%s569 + $0x40] sm:$0xff]
        %v621 = vld [vmem:[%s569 + $0x48] sm:$0xff]
        %v622 = vld [vmem:[%s569 + $0x50] sm:$0xff]
        %v623 = vld [vmem:[%s569 + $0x58] sm:$0xff]
        %v624 = vld [vmem:[%s569 + $0x60] sm:$0xff]
        %v625 = vld [vmem:[%s569 + $0x68] sm:$0xff]
        %v626 = vld [vmem:[%s569 + $0x70] sm:$0xff]
        %v627 = vld [vmem:[%s569 + $0x78] sm:$0xff]
        %v628 = vld [vmem:[%s1] sm:$0xff]
        %v629 = vld [vmem:[%s1 + $0x8] sm:$0xff]
        %v630 = vld [vmem:[%s1 + $0x10] sm:$0xff]
        %v631 = vld [vmem:[%s1 + $0x18] sm:$0xff]
        %v632 = vld [vmem:[%s1 + $0x20] sm:$0xff]
        %v633 = vld [vmem:[%s1 + $0x28] sm:$0xff]
        %v634 = vld [vmem:[%s1 + $0x30] sm:$0xff]
        %v635 = vld [vmem:[%s1 + $0x38] sm:$0xff]
        %v636 = vld [vmem:[%s1 + $0x40] sm:$0xff]
        %v637 = vld [vmem:[%s1 + $0x48] sm:$0xff]
        %v638 = vld [vmem:[%s1 + $0x50] sm:$0xff]
        %v639 = vld [vmem:[%s1 + $0x58] sm:$0xff]
        %v640 = vld [vmem:[%s1 + $0x60] sm:$0xff]
        %v641 = vld [vmem:[%s1 + $0x68] sm:$0xff]
        %v642 = vld [vmem:[%s1 + $0x70] sm:$0xff]
        %v643 = vld [vmem:[%s1 + $0x78] sm:$0xff]
        %v644 = vld [vmem:[%s1 + $0x80] sm:$0xff]
        %v645 = vld [vmem:[%s1 + $0x88] sm:$0xff]
        %v646 = vld [vmem:[%s1 + $0x90] sm:$0xff]
        %v647 = vld [vmem:[%s1 + $0x98] sm:$0xff]
        %v648 = vld [vmem:[%s1 + $0xa0] sm:$0xff]
        %v649 = vld [vmem:[%s1 + $0xa8] sm:$0xff]
        %v650 = vld [vmem:[%s1 + $0xb0] sm:$0xff]
        %v651 = vld [vmem:[%s1 + $0xb8] sm:$0xff]
        %v652 = vld [vmem:[%s1 + $0xc0] sm:$0xff]
        %v653 = vld [vmem:[%s1 + $0xc8] sm:$0xff]
        %v654 = vld [vmem:[%s1 + $0xd0] sm:$0xff]
        %v655 = vld [vmem:[%s1 + $0xd8] sm:$0xff]
        %v656 = vld [vmem:[%s1 + $0xe0] sm:$0xff]
        %v657 = vld [vmem:[%s1 + $0xe8] sm:$0xff]
        %v658 = vld [vmem:[%s1 + $0xf0] sm:$0xff]
        %v659 = vld [vmem:[%s1 + $0xf8] sm:$0xff]
        %v660 = vld [vmem:[%s1 + $0x100] sm:$0xff]
        %v661 = vld [vmem:[%s1 + $0x108] sm:$0xff]
        %v662 = vld [vmem:[%s1 + $0x110] sm:$0xff]
        %v663 = vld [vmem:[%s1 + $0x118] sm:$0xff]
        %v664 = vld [vmem:[%s1 + $0x120] sm:$0xff]
        %v665 = vld [vmem:[%s1 + $0x128] sm:$0xff]
        %v666 = vld [vmem:[%s1 + $0x130] sm:$0xff]
        %v667 = vld [vmem:[%s1 + $0x138] sm:$0xff]
        %v668 = vld [vmem:[%s1 + $0x140] sm:$0xff]
        %v669 = vld [vmem:[%s1 + $0x148] sm:$0xff]
        %v670 = vld [vmem:[%s1 + $0x150] sm:$0xff]
        %v671 = vld [vmem:[%s1 + $0x158] sm:$0xff]
        %v672 = vld [vmem:[%s1 + $0x160] sm:$0xff]
        %v673 = vld [vmem:[%s1 + $0x168] sm:$0xff]
        %v674 = vld [vmem:[%s1 + $0x170] sm:$0xff]
        %v675 = vld [vmem:[%s1 + $0x178] sm:$0xff]
        %v676 = vld [vmem:[%s1 + $0x180] sm:$0xff]
        %v677 = vld [vmem:[%s1 + $0x188] sm:$0xff]
        %v678 = vld [vmem:[%s1 + $0x190] sm:$0xff]
        %v679 = vld [vmem:[%s1 + $0x198] sm:$0xff]
        %v680 = vld [vmem:[%s1 + $0x1a0] sm:$0xff]
        %v681 = vld [vmem:[%s1 + $0x1a8] sm:$0xff]
        %v682 = vld [vmem:[%s1 + $0x1b0] sm:$0xff]
        %v683 = vld [vmem:[%s1 + $0x1b8] sm:$0xff]
        %v684 = vld [vmem:[%s1 + $0x1c0] sm:$0xff]
        %v685 = vld [vmem:[%s1 + $0x1c8] sm:$0xff]
        %v686 = vld [vmem:[%s1 + $0x1d0] sm:$0xff]
        %v687 = vld [vmem:[%s1 + $0x1d8] sm:$0xff]
        %v688 = vld [vmem:[%s1 + $0x1e0] sm:$0xff]
        %v689 = vld [vmem:[%s1 + $0x1e8] sm:$0xff]
        %v690 = vld [vmem:[%s1 + $0x1f0] sm:$0xff]
        %v691 = vld [vmem:[%s1 + $0x1f8] sm:$0xff]
        %s692 = scalar_lea.vmem %s569, 128 [#allocation2]
        %v693 = vld [vmem:[%s692] sm:$0xff]
        %v694 = vld [vmem:[%s692 + $0x8] sm:$0xff]
        %v695 = vld [vmem:[%s692 + $0x10] sm:$0xff]
        %v696 = vld [vmem:[%s692 + $0x18] sm:$0xff]
        %v697 = vld [vmem:[%s692 + $0x20] sm:$0xff]
        %v698 = vld [vmem:[%s692 + $0x28] sm:$0xff]
        %v699 = vld [vmem:[%s692 + $0x30] sm:$0xff]
        %v700 = vld [vmem:[%s692 + $0x38] sm:$0xff]
        %v701 = vld [vmem:[%s692 + $0x40] sm:$0xff]
        %v702 = vld [vmem:[%s692 + $0x48] sm:$0xff]
        %v703 = vld [vmem:[%s692 + $0x50] sm:$0xff]
        %v704 = vld [vmem:[%s692 + $0x58] sm:$0xff]
        %v705 = vld [vmem:[%s692 + $0x60] sm:$0xff]
        %v706 = vld [vmem:[%s692 + $0x68] sm:$0xff]
        %v707 = vld [vmem:[%s692 + $0x70] sm:$0xff]
        %v708 = vld [vmem:[%s692 + $0x78] sm:$0xff]
        %s709 = scalar_lea.vmem %s1, 512
        %v710 = vld [vmem:[%s709] sm:$0xff]
        %v711 = vld [vmem:[%s709 + $0x8] sm:$0xff]
        %v712 = vld [vmem:[%s709 + $0x10] sm:$0xff]
        %v713 = vld [vmem:[%s709 + $0x18] sm:$0xff]
        %v714 = vld [vmem:[%s709 + $0x20] sm:$0xff]
        %v715 = vld [vmem:[%s709 + $0x28] sm:$0xff]
        %v716 = vld [vmem:[%s709 + $0x30] sm:$0xff]
        %v717 = vld [vmem:[%s709 + $0x38] sm:$0xff]
        %v718 = vld [vmem:[%s709 + $0x40] sm:$0xff]
        %v719 = vld [vmem:[%s709 + $0x48] sm:$0xff]
        %v720 = vld [vmem:[%s709 + $0x50] sm:$0xff]
        %v721 = vld [vmem:[%s709 + $0x58] sm:$0xff]
        %v722 = vld [vmem:[%s709 + $0x60] sm:$0xff]
        %v723 = vld [vmem:[%s709 + $0x68] sm:$0xff]
        %v724 = vld [vmem:[%s709 + $0x70] sm:$0xff]
        %v725 = vld [vmem:[%s709 + $0x78] sm:$0xff]
        %v726 = vld [vmem:[%s709 + $0x80] sm:$0xff]
        %v727 = vld [vmem:[%s709 + $0x88] sm:$0xff]
        %v728 = vld [vmem:[%s709 + $0x90] sm:$0xff]
        %v729 = vld [vmem:[%s709 + $0x98] sm:$0xff]
        %v730 = vld [vmem:[%s709 + $0xa0] sm:$0xff]
        %v731 = vld [vmem:[%s709 + $0xa8] sm:$0xff]
        %v732 = vld [vmem:[%s709 + $0xb0] sm:$0xff]
        %v733 = vld [vmem:[%s709 + $0xb8] sm:$0xff]
        %v734 = vld [vmem:[%s709 + $0xc0] sm:$0xff]
        %v735 = vld [vmem:[%s709 + $0xc8] sm:$0xff]
        %v736 = vld [vmem:[%s709 + $0xd0] sm:$0xff]
        %v737 = vld [vmem:[%s709 + $0xd8] sm:$0xff]
        %v738 = vld [vmem:[%s709 + $0xe0] sm:$0xff]
        %v739 = vld [vmem:[%s709 + $0xe8] sm:$0xff]
        %v740 = vld [vmem:[%s709 + $0xf0] sm:$0xff]
        %v741 = vld [vmem:[%s709 + $0xf8] sm:$0xff]
        %v742 = vld [vmem:[%s709 + $0x100] sm:$0xff]
        %v743 = vld [vmem:[%s709 + $0x108] sm:$0xff]
        %v744 = vld [vmem:[%s709 + $0x110] sm:$0xff]
        %v745 = vld [vmem:[%s709 + $0x118] sm:$0xff]
        %v746 = vld [vmem:[%s709 + $0x120] sm:$0xff]
        %v747 = vld [vmem:[%s709 + $0x128] sm:$0xff]
        %v748 = vld [vmem:[%s709 + $0x130] sm:$0xff]
        %v749 = vld [vmem:[%s709 + $0x138] sm:$0xff]
        %v750 = vld [vmem:[%s709 + $0x140] sm:$0xff]
        %v751 = vld [vmem:[%s709 + $0x148] sm:$0xff]
        %v752 = vld [vmem:[%s709 + $0x150] sm:$0xff]
        %v753 = vld [vmem:[%s709 + $0x158] sm:$0xff]
        %v754 = vld [vmem:[%s709 + $0x160] sm:$0xff]
        %v755 = vld [vmem:[%s709 + $0x168] sm:$0xff]
        %v756 = vld [vmem:[%s709 + $0x170] sm:$0xff]
        %v757 = vld [vmem:[%s709 + $0x178] sm:$0xff]
        %v758 = vld [vmem:[%s709 + $0x180] sm:$0xff]
        %v759 = vld [vmem:[%s709 + $0x188] sm:$0xff]
        %v760 = vld [vmem:[%s709 + $0x190] sm:$0xff]
        %v761 = vld [vmem:[%s709 + $0x198] sm:$0xff]
        %v762 = vld [vmem:[%s709 + $0x1a0] sm:$0xff]
        %v763 = vld [vmem:[%s709 + $0x1a8] sm:$0xff]
        %v764 = vld [vmem:[%s709 + $0x1b0] sm:$0xff]
        %v765 = vld [vmem:[%s709 + $0x1b8] sm:$0xff]
        %v766 = vld [vmem:[%s709 + $0x1c0] sm:$0xff]
        %v767 = vld [vmem:[%s709 + $0x1c8] sm:$0xff]
        %v768 = vld [vmem:[%s709 + $0x1d0] sm:$0xff]
        %v769 = vld [vmem:[%s709 + $0x1d8] sm:$0xff]
        %v770 = vld [vmem:[%s709 + $0x1e0] sm:$0xff]
        %v771 = vld [vmem:[%s709 + $0x1e8] sm:$0xff]
        %v772 = vld [vmem:[%s709 + $0x1f0] sm:$0xff]
        %v773 = vld [vmem:[%s709 + $0x1f8] sm:$0xff]
        %774 = vmatpush.msra.mxu0 %v770
        %775 = vmatpush.msra.mxu0 %v766
        %776 = vmatpush.msra.mxu0 %v762
        %777 = vmatpush.msra.mxu0 %v758
        %778 = vmatpush.msra.mxu0 %v754
        %779 = vmatpush.msra.mxu0 %v750
        %780 = vmatpush.msra.mxu0 %v746
        %781 = vmatpush.msra.mxu0 %v742
        %782 = vmatpush.msra.mxu0 %v738
        %783 = vmatpush.msra.mxu0 %v734
        %784 = vmatpush.msra.mxu0 %v730
        %785 = vmatpush.msra.mxu0 %v726
        %786 = vmatpush.msra.mxu0 %v722
        %787 = vmatpush.msra.mxu0 %v718
        %788 = vmatpush.msra.mxu0 %v714
        %789 = vmatpush.msra.mxu0 %v710
        %790 = vmatmul.f32.gmra.mxu0 %v693
        %v791 = vpop.f32.mrf.mxu0
        %v792 = vadd.f32 0.0, %v791
        %793 = vmatmul.f32.gmra.mxu0 %v694
        %v794 = vpop.f32.mrf.mxu0
        %v795 = vadd.f32 0.0, %v794
        %796 = vmatmul.f32.gmra.mxu0 %v695
        %v797 = vpop.f32.mrf.mxu0
        %v798 = vadd.f32 0.0, %v797
        %799 = vmatmul.f32.gmra.mxu0 %v696
        %v800 = vpop.f32.mrf.mxu0
        %v801 = vadd.f32 0.0, %v800
        %802 = vmatmul.f32.gmra.mxu0 %v697
        %v803 = vpop.f32.mrf.mxu0
        %v804 = vadd.f32 0.0, %v803
        %805 = vmatmul.f32.gmra.mxu0 %v698
        %v806 = vpop.f32.mrf.mxu0
        %v807 = vadd.f32 0.0, %v806
        %808 = vmatmul.f32.gmra.mxu0 %v699
        %v809 = vpop.f32.mrf.mxu0
        %v810 = vadd.f32 0.0, %v809
        %811 = vmatmul.f32.gmra.mxu0 %v700
        %v812 = vpop.f32.mrf.mxu0
        %v813 = vadd.f32 0.0, %v812
        %814 = vmatmul.f32.gmra.mxu0 %v701
        %v815 = vpop.f32.mrf.mxu0
        %v816 = vadd.f32 0.0, %v815
        %817 = vmatmul.f32.gmra.mxu0 %v702
        %v818 = vpop.f32.mrf.mxu0
        %v819 = vadd.f32 0.0, %v818
        %820 = vmatmul.f32.gmra.mxu0 %v703
        %v821 = vpop.f32.mrf.mxu0
        %v822 = vadd.f32 0.0, %v821
        %823 = vmatmul.f32.gmra.mxu0 %v704
        %v824 = vpop.f32.mrf.mxu0
        %v825 = vadd.f32 0.0, %v824
        %826 = vmatmul.f32.gmra.mxu0 %v705
        %v827 = vpop.f32.mrf.mxu0
        %v828 = vadd.f32 0.0, %v827
        %829 = vmatmul.f32.gmra.mxu0 %v706
        %v830 = vpop.f32.mrf.mxu0
        %v831 = vadd.f32 0.0, %v830
        %832 = vmatmul.f32.gmra.mxu0 %v707
        %v833 = vpop.f32.mrf.mxu0
        %v834 = vadd.f32 0.0, %v833
        %835 = vmatmul.f32.gmra.mxu0 %v708
        %v836 = vpop.f32.mrf.mxu0
        %v837 = vadd.f32 0.0, %v836
        %838 = vdwg.mxu0
        %839 = vmatpush.msra.mxu0 %v771
        %840 = vmatpush.msra.mxu0 %v767
        %841 = vmatpush.msra.mxu0 %v763
        %842 = vmatpush.msra.mxu0 %v759
        %843 = vmatpush.msra.mxu0 %v755
        %844 = vmatpush.msra.mxu0 %v751
        %845 = vmatpush.msra.mxu0 %v747
        %846 = vmatpush.msra.mxu0 %v743
        %847 = vmatpush.msra.mxu0 %v739
        %848 = vmatpush.msra.mxu0 %v735
        %849 = vmatpush.msra.mxu0 %v731
        %850 = vmatpush.msra.mxu0 %v727
        %851 = vmatpush.msra.mxu0 %v723
        %852 = vmatpush.msra.mxu0 %v719
        %853 = vmatpush.msra.mxu0 %v715
        %854 = vmatpush.msra.mxu0 %v711
        %855 = vmatmul.f32.gmra.mxu0 %v693
        %v856 = vpop.f32.mrf.mxu0
        %v857 = vadd.f32 0.0, %v856
        %858 = vmatmul.f32.gmra.mxu0 %v694
        %v859 = vpop.f32.mrf.mxu0
        %v860 = vadd.f32 0.0, %v859
        %861 = vmatmul.f32.gmra.mxu0 %v695
        %v862 = vpop.f32.mrf.mxu0
        %v863 = vadd.f32 0.0, %v862
        %864 = vmatmul.f32.gmra.mxu0 %v696
        %v865 = vpop.f32.mrf.mxu0
        %v866 = vadd.f32 0.0, %v865
        %867 = vmatmul.f32.gmra.mxu0 %v697
        %v868 = vpop.f32.mrf.mxu0
        %v869 = vadd.f32 0.0, %v868
        %870 = vmatmul.f32.gmra.mxu0 %v698
        %v871 = vpop.f32.mrf.mxu0
        %v872 = vadd.f32 0.0, %v871
        %873 = vmatmul.f32.gmra.mxu0 %v699
        %v874 = vpop.f32.mrf.mxu0
        %v875 = vadd.f32 0.0, %v874
        %876 = vmatmul.f32.gmra.mxu0 %v700
        %v877 = vpop.f32.mrf.mxu0
        %v878 = vadd.f32 0.0, %v877
        %879 = vmatmul.f32.gmra.mxu0 %v701
        %v880 = vpop.f32.mrf.mxu0
        %v881 = vadd.f32 0.0, %v880
        %882 = vmatmul.f32.gmra.mxu0 %v702
        %v883 = vpop.f32.mrf.mxu0
        %v884 = vadd.f32 0.0, %v883
        %885 = vmatmul.f32.gmra.mxu0 %v703
        %v886 = vpop.f32.mrf.mxu0
        %v887 = vadd.f32 0.0, %v886
        %888 = vmatmul.f32.gmra.mxu0 %v704
        %v889 = vpop.f32.mrf.mxu0
        %v890 = vadd.f32 0.0, %v889
        %891 = vmatmul.f32.gmra.mxu0 %v705
        %v892 = vpop.f32.mrf.mxu0
        %v893 = vadd.f32 0.0, %v892
        %894 = vmatmul.f32.gmra.mxu0 %v706
        %v895 = vpop.f32.mrf.mxu0
        %v896 = vadd.f32 0.0, %v895
        %897 = vmatmul.f32.gmra.mxu0 %v707
        %v898 = vpop.f32.mrf.mxu0
        %v899 = vadd.f32 0.0, %v898
        %900 = vmatmul.f32.gmra.mxu0 %v708
        %v901 = vpop.f32.mrf.mxu0
        %v902 = vadd.f32 0.0, %v901
        %903 = vdwg.mxu0
        %904 = vmatpush.msra.mxu0 %v772
        %905 = vmatpush.msra.mxu0 %v768
        %906 = vmatpush.msra.mxu0 %v764
        %907 = vmatpush.msra.mxu0 %v760
        %908 = vmatpush.msra.mxu0 %v756
        %909 = vmatpush.msra.mxu0 %v752
        %910 = vmatpush.msra.mxu0 %v748
        %911 = vmatpush.msra.mxu0 %v744
        %912 = vmatpush.msra.mxu0 %v740
        %913 = vmatpush.msra.mxu0 %v736
        %914 = vmatpush.msra.mxu0 %v732
        %915 = vmatpush.msra.mxu0 %v728
        %916 = vmatpush.msra.mxu0 %v724
        %917 = vmatpush.msra.mxu0 %v720
        %918 = vmatpush.msra.mxu0 %v716
        %919 = vmatpush.msra.mxu0 %v712
        %920 = vmatmul.f32.gmra.mxu0 %v693
        %v921 = vpop.f32.mrf.mxu0
        %v922 = vadd.f32 0.0, %v921
        %923 = vmatmul.f32.gmra.mxu0 %v694
        %v924 = vpop.f32.mrf.mxu0
        %v925 = vadd.f32 0.0, %v924
        %926 = vmatmul.f32.gmra.mxu0 %v695
        %v927 = vpop.f32.mrf.mxu0
        %v928 = vadd.f32 0.0, %v927
        %929 = vmatmul.f32.gmra.mxu0 %v696
        %v930 = vpop.f32.mrf.mxu0
        %v931 = vadd.f32 0.0, %v930
        %932 = vmatmul.f32.gmra.mxu0 %v697
        %v933 = vpop.f32.mrf.mxu0
        %v934 = vadd.f32 0.0, %v933
        %935 = vmatmul.f32.gmra.mxu0 %v698
        %v936 = vpop.f32.mrf.mxu0
        %v937 = vadd.f32 0.0, %v936
        %938 = vmatmul.f32.gmra.mxu0 %v699
        %v939 = vpop.f32.mrf.mxu0
        %v940 = vadd.f32 0.0, %v939
        %941 = vmatmul.f32.gmra.mxu0 %v700
        %v942 = vpop.f32.mrf.mxu0
        %v943 = vadd.f32 0.0, %v942
        %944 = vmatmul.f32.gmra.mxu0 %v701
        %v945 = vpop.f32.mrf.mxu0
        %v946 = vadd.f32 0.0, %v945
        %947 = vmatmul.f32.gmra.mxu0 %v702
        %v948 = vpop.f32.mrf.mxu0
        %v949 = vadd.f32 0.0, %v948
        %950 = vmatmul.f32.gmra.mxu0 %v703
        %v951 = vpop.f32.mrf.mxu0
        %v952 = vadd.f32 0.0, %v951
        %953 = vmatmul.f32.gmra.mxu0 %v704
        %v954 = vpop.f32.mrf.mxu0
        %v955 = vadd.f32 0.0, %v954
        %956 = vmatmul.f32.gmra.mxu0 %v705
        %v957 = vpop.f32.mrf.mxu0
        %v958 = vadd.f32 0.0, %v957
        %959 = vmatmul.f32.gmra.mxu0 %v706
        %v960 = vpop.f32.mrf.mxu0
        %v961 = vadd.f32 0.0, %v960
        %962 = vmatmul.f32.gmra.mxu0 %v707
        %v963 = vpop.f32.mrf.mxu0
        %v964 = vadd.f32 0.0, %v963
        %965 = vmatmul.f32.gmra.mxu0 %v708
        %v966 = vpop.f32.mrf.mxu0
        %v967 = vadd.f32 0.0, %v966
        %968 = vdwg.mxu0
        %969 = vmatpush.msra.mxu0 %v773
        %970 = vmatpush.msra.mxu0 %v769
        %971 = vmatpush.msra.mxu0 %v765
        %972 = vmatpush.msra.mxu0 %v761
        %973 = vmatpush.msra.mxu0 %v757
        %974 = vmatpush.msra.mxu0 %v753
        %975 = vmatpush.msra.mxu0 %v749
        %976 = vmatpush.msra.mxu0 %v745
        %977 = vmatpush.msra.mxu0 %v741
        %978 = vmatpush.msra.mxu0 %v737
        %979 = vmatpush.msra.mxu0 %v733
        %980 = vmatpush.msra.mxu0 %v729
        %981 = vmatpush.msra.mxu0 %v725
        %982 = vmatpush.msra.mxu0 %v721
        %983 = vmatpush.msra.mxu0 %v717
        %984 = vmatpush.msra.mxu0 %v713
        %985 = vmatmul.f32.gmra.mxu0 %v693
        %v986 = vpop.f32.mrf.mxu0
        %v987 = vadd.f32 0.0, %v986
        %988 = vmatmul.f32.gmra.mxu0 %v694
        %v989 = vpop.f32.mrf.mxu0
        %v990 = vadd.f32 0.0, %v989
        %991 = vmatmul.f32.gmra.mxu0 %v695
        %v992 = vpop.f32.mrf.mxu0
        %v993 = vadd.f32 0.0, %v992
        %994 = vmatmul.f32.gmra.mxu0 %v696
        %v995 = vpop.f32.mrf.mxu0
        %v996 = vadd.f32 0.0, %v995
        %997 = vmatmul.f32.gmra.mxu0 %v697
        %v998 = vpop.f32.mrf.mxu0
        %v999 = vadd.f32 0.0, %v998
        %1000 = vmatmul.f32.gmra.mxu0 %v698
        %v1001 = vpop.f32.mrf.mxu0
        %v1002 = vadd.f32 0.0, %v1001
        %1003 = vmatmul.f32.gmra.mxu0 %v699
        %v1004 = vpop.f32.mrf.mxu0
        %v1005 = vadd.f32 0.0, %v1004
        %1006 = vmatmul.f32.gmra.mxu0 %v700
        %v1007 = vpop.f32.mrf.mxu0
        %v1008 = vadd.f32 0.0, %v1007
        %1009 = vmatmul.f32.gmra.mxu0 %v701
        %v1010 = vpop.f32.mrf.mxu0
        %v1011 = vadd.f32 0.0, %v1010
        %1012 = vmatmul.f32.gmra.mxu0 %v702
        %v1013 = vpop.f32.mrf.mxu0
        %v1014 = vadd.f32 0.0, %v1013
        %1015 = vmatmul.f32.gmra.mxu0 %v703
        %v1016 = vpop.f32.mrf.mxu0
        %v1017 = vadd.f32 0.0, %v1016
        %1018 = vmatmul.f32.gmra.mxu0 %v704
        %v1019 = vpop.f32.mrf.mxu0
        %v1020 = vadd.f32 0.0, %v1019
        %1021 = vmatmul.f32.gmra.mxu0 %v705
        %v1022 = vpop.f32.mrf.mxu0
        %v1023 = vadd.f32 0.0, %v1022
        %1024 = vmatmul.f32.gmra.mxu0 %v706
        %v1025 = vpop.f32.mrf.mxu0
        %v1026 = vadd.f32 0.0, %v1025
        %1027 = vmatmul.f32.gmra.mxu0 %v707
        %v1028 = vpop.f32.mrf.mxu0
        %v1029 = vadd.f32 0.0, %v1028
        %1030 = vmatmul.f32.gmra.mxu0 %v708
        %v1031 = vpop.f32.mrf.mxu0
        %v1032 = vadd.f32 0.0, %v1031
        %1033 = vdwg.mxu0
        %1034 = vmatpush.msra.mxu0 %v688
        %1035 = vmatpush.msra.mxu0 %v684
        %1036 = vmatpush.msra.mxu0 %v680
        %1037 = vmatpush.msra.mxu0 %v676
        %1038 = vmatpush.msra.mxu0 %v672
        %1039 = vmatpush.msra.mxu0 %v668
        %1040 = vmatpush.msra.mxu0 %v664
        %1041 = vmatpush.msra.mxu0 %v660
        %1042 = vmatpush.msra.mxu0 %v656
        %1043 = vmatpush.msra.mxu0 %v652
        %1044 = vmatpush.msra.mxu0 %v648
        %1045 = vmatpush.msra.mxu0 %v644
        %1046 = vmatpush.msra.mxu0 %v640
        %1047 = vmatpush.msra.mxu0 %v636
        %1048 = vmatpush.msra.mxu0 %v632
        %1049 = vmatpush.msra.mxu0 %v628
        %1050 = vmatmul.f32.gmra.mxu0 %v612
        %v1051 = vpop.f32.mrf.mxu0
        %v1052 = vadd.f32 %v792, %v1051
        %1053 = vmatmul.f32.gmra.mxu0 %v613
        %v1054 = vpop.f32.mrf.mxu0
        %v1055 = vadd.f32 %v795, %v1054
        %1056 = vmatmul.f32.gmra.mxu0 %v614
        %v1057 = vpop.f32.mrf.mxu0
        %v1058 = vadd.f32 %v798, %v1057
        %1059 = vmatmul.f32.gmra.mxu0 %v615
        %v1060 = vpop.f32.mrf.mxu0
        %v1061 = vadd.f32 %v801, %v1060
        %1062 = vmatmul.f32.gmra.mxu0 %v616
        %v1063 = vpop.f32.mrf.mxu0
        %v1064 = vadd.f32 %v804, %v1063
        %1065 = vmatmul.f32.gmra.mxu0 %v617
        %v1066 = vpop.f32.mrf.mxu0
        %v1067 = vadd.f32 %v807, %v1066
        %1068 = vmatmul.f32.gmra.mxu0 %v618
        %v1069 = vpop.f32.mrf.mxu0
        %v1070 = vadd.f32 %v810, %v1069
        %1071 = vmatmul.f32.gmra.mxu0 %v619
        %v1072 = vpop.f32.mrf.mxu0
        %v1073 = vadd.f32 %v813, %v1072
        %1074 = vmatmul.f32.gmra.mxu0 %v620
        %v1075 = vpop.f32.mrf.mxu0
        %v1076 = vadd.f32 %v816, %v1075
        %1077 = vmatmul.f32.gmra.mxu0 %v621
        %v1078 = vpop.f32.mrf.mxu0
        %v1079 = vadd.f32 %v819, %v1078
        %1080 = vmatmul.f32.gmra.mxu0 %v622
        %v1081 = vpop.f32.mrf.mxu0
        %v1082 = vadd.f32 %v822, %v1081
        %1083 = vmatmul.f32.gmra.mxu0 %v623
        %v1084 = vpop.f32.mrf.mxu0
        %v1085 = vadd.f32 %v825, %v1084
        %1086 = vmatmul.f32.gmra.mxu0 %v624
        %v1087 = vpop.f32.mrf.mxu0
        %v1088 = vadd.f32 %v828, %v1087
        %1089 = vmatmul.f32.gmra.mxu0 %v625
        %v1090 = vpop.f32.mrf.mxu0
        %v1091 = vadd.f32 %v831, %v1090
        %1092 = vmatmul.f32.gmra.mxu0 %v626
        %v1093 = vpop.f32.mrf.mxu0
        %v1094 = vadd.f32 %v834, %v1093
        %1095 = vmatmul.f32.gmra.mxu0 %v627
        %v1096 = vpop.f32.mrf.mxu0
        %v1097 = vadd.f32 %v837, %v1096
        %1098 = vdwg.mxu0
        %1099 = vmatpush.msra.mxu0 %v689
        %1100 = vmatpush.msra.mxu0 %v685
        %1101 = vmatpush.msra.mxu0 %v681
        %1102 = vmatpush.msra.mxu0 %v677
        %1103 = vmatpush.msra.mxu0 %v673
        %1104 = vmatpush.msra.mxu0 %v669
        %1105 = vmatpush.msra.mxu0 %v665
        %1106 = vmatpush.msra.mxu0 %v661
        %1107 = vmatpush.msra.mxu0 %v657
        %1108 = vmatpush.msra.mxu0 %v653
        %1109 = vmatpush.msra.mxu0 %v649
        %1110 = vmatpush.msra.mxu0 %v645
        %1111 = vmatpush.msra.mxu0 %v641
        %1112 = vmatpush.msra.mxu0 %v637
        %1113 = vmatpush.msra.mxu0 %v633
        %1114 = vmatpush.msra.mxu0 %v629
        %1115 = vmatmul.f32.gmra.mxu0 %v612
        %v1116 = vpop.f32.mrf.mxu0
        %v1117 = vadd.f32 %v857, %v1116
        %1118 = vmatmul.f32.gmra.mxu0 %v613
        %v1119 = vpop.f32.mrf.mxu0
        %v1120 = vadd.f32 %v860, %v1119
        %1121 = vmatmul.f32.gmra.mxu0 %v614
        %v1122 = vpop.f32.mrf.mxu0
        %v1123 = vadd.f32 %v863, %v1122
        %1124 = vmatmul.f32.gmra.mxu0 %v615
        %v1125 = vpop.f32.mrf.mxu0
        %v1126 = vadd.f32 %v866, %v1125
        %1127 = vmatmul.f32.gmra.mxu0 %v616
        %v1128 = vpop.f32.mrf.mxu0
        %v1129 = vadd.f32 %v869, %v1128
        %1130 = vmatmul.f32.gmra.mxu0 %v617
        %v1131 = vpop.f32.mrf.mxu0
        %v1132 = vadd.f32 %v872, %v1131
        %1133 = vmatmul.f32.gmra.mxu0 %v618
        %v1134 = vpop.f32.mrf.mxu0
        %v1135 = vadd.f32 %v875, %v1134
        %1136 = vmatmul.f32.gmra.mxu0 %v619
        %v1137 = vpop.f32.mrf.mxu0
        %v1138 = vadd.f32 %v878, %v1137
        %1139 = vmatmul.f32.gmra.mxu0 %v620
        %v1140 = vpop.f32.mrf.mxu0
        %v1141 = vadd.f32 %v881, %v1140
        %1142 = vmatmul.f32.gmra.mxu0 %v621
        %v1143 = vpop.f32.mrf.mxu0
        %v1144 = vadd.f32 %v884, %v1143
        %1145 = vmatmul.f32.gmra.mxu0 %v622
        %v1146 = vpop.f32.mrf.mxu0
        %v1147 = vadd.f32 %v887, %v1146
        %1148 = vmatmul.f32.gmra.mxu0 %v623
        %v1149 = vpop.f32.mrf.mxu0
        %v1150 = vadd.f32 %v890, %v1149
        %1151 = vmatmul.f32.gmra.mxu0 %v624
        %v1152 = vpop.f32.mrf.mxu0
        %v1153 = vadd.f32 %v893, %v1152
        %1154 = vmatmul.f32.gmra.mxu0 %v625
        %v1155 = vpop.f32.mrf.mxu0
        %v1156 = vadd.f32 %v896, %v1155
        %1157 = vmatmul.f32.gmra.mxu0 %v626
        %v1158 = vpop.f32.mrf.mxu0
        %v1159 = vadd.f32 %v899, %v1158
        %1160 = vmatmul.f32.gmra.mxu0 %v627
        %v1161 = vpop.f32.mrf.mxu0
        %v1162 = vadd.f32 %v902, %v1161
        %1163 = vdwg.mxu0
        %1164 = vmatpush.msra.mxu0 %v690
        %1165 = vmatpush.msra.mxu0 %v686
        %1166 = vmatpush.msra.mxu0 %v682
        %1167 = vmatpush.msra.mxu0 %v678
        %1168 = vmatpush.msra.mxu0 %v674
        %1169 = vmatpush.msra.mxu0 %v670
        %1170 = vmatpush.msra.mxu0 %v666
        %1171 = vmatpush.msra.mxu0 %v662
        %1172 = vmatpush.msra.mxu0 %v658
        %1173 = vmatpush.msra.mxu0 %v654
        %1174 = vmatpush.msra.mxu0 %v650
        %1175 = vmatpush.msra.mxu0 %v646
        %1176 = vmatpush.msra.mxu0 %v642
        %1177 = vmatpush.msra.mxu0 %v638
        %1178 = vmatpush.msra.mxu0 %v634
        %1179 = vmatpush.msra.mxu0 %v630
        %1180 = vmatmul.f32.gmra.mxu0 %v612
        %v1181 = vpop.f32.mrf.mxu0
        %v1182 = vadd.f32 %v922, %v1181
        %1183 = vmatmul.f32.gmra.mxu0 %v613
        %v1184 = vpop.f32.mrf.mxu0
        %v1185 = vadd.f32 %v925, %v1184
        %1186 = vmatmul.f32.gmra.mxu0 %v614
        %v1187 = vpop.f32.mrf.mxu0
        %v1188 = vadd.f32 %v928, %v1187
        %1189 = vmatmul.f32.gmra.mxu0 %v615
        %v1190 = vpop.f32.mrf.mxu0
        %v1191 = vadd.f32 %v931, %v1190
        %1192 = vmatmul.f32.gmra.mxu0 %v616
        %v1193 = vpop.f32.mrf.mxu0
        %v1194 = vadd.f32 %v934, %v1193
        %1195 = vmatmul.f32.gmra.mxu0 %v617
        %v1196 = vpop.f32.mrf.mxu0
        %v1197 = vadd.f32 %v937, %v1196
        %1198 = vmatmul.f32.gmra.mxu0 %v618
        %v1199 = vpop.f32.mrf.mxu0
        %v1200 = vadd.f32 %v940, %v1199
        %1201 = vmatmul.f32.gmra.mxu0 %v619
        %v1202 = vpop.f32.mrf.mxu0
        %v1203 = vadd.f32 %v943, %v1202
        %1204 = vmatmul.f32.gmra.mxu0 %v620
        %v1205 = vpop.f32.mrf.mxu0
        %v1206 = vadd.f32 %v946, %v1205
        %1207 = vmatmul.f32.gmra.mxu0 %v621
        %v1208 = vpop.f32.mrf.mxu0
        %v1209 = vadd.f32 %v949, %v1208
        %1210 = vmatmul.f32.gmra.mxu0 %v622
        %v1211 = vpop.f32.mrf.mxu0
        %v1212 = vadd.f32 %v952, %v1211
        %1213 = vmatmul.f32.gmra.mxu0 %v623
        %v1214 = vpop.f32.mrf.mxu0
        %v1215 = vadd.f32 %v955, %v1214
        %1216 = vmatmul.f32.gmra.mxu0 %v624
        %v1217 = vpop.f32.mrf.mxu0
        %v1218 = vadd.f32 %v958, %v1217
        %1219 = vmatmul.f32.gmra.mxu0 %v625
        %v1220 = vpop.f32.mrf.mxu0
        %v1221 = vadd.f32 %v961, %v1220
        %1222 = vmatmul.f32.gmra.mxu0 %v626
        %v1223 = vpop.f32.mrf.mxu0
        %v1224 = vadd.f32 %v964, %v1223
        %1225 = vmatmul.f32.gmra.mxu0 %v627
        %v1226 = vpop.f32.mrf.mxu0
        %v1227 = vadd.f32 %v967, %v1226
        %1228 = vdwg.mxu0
        %1229 = vmatpush.msra.mxu0 %v691
        %1230 = vmatpush.msra.mxu0 %v687
        %1231 = vmatpush.msra.mxu0 %v683
        %1232 = vmatpush.msra.mxu0 %v679
        %1233 = vmatpush.msra.mxu0 %v675
        %1234 = vmatpush.msra.mxu0 %v671
        %1235 = vmatpush.msra.mxu0 %v667
        %1236 = vmatpush.msra.mxu0 %v663
        %1237 = vmatpush.msra.mxu0 %v659
        %1238 = vmatpush.msra.mxu0 %v655
        %1239 = vmatpush.msra.mxu0 %v651
        %1240 = vmatpush.msra.mxu0 %v647
        %1241 = vmatpush.msra.mxu0 %v643
        %1242 = vmatpush.msra.mxu0 %v639
        %1243 = vmatpush.msra.mxu0 %v635
        %1244 = vmatpush.msra.mxu0 %v631
        %1245 = vmatmul.f32.gmra.mxu0 %v612
        %v1246 = vpop.f32.mrf.mxu0
        %v1247 = vadd.f32 %v987, %v1246
        %1248 = vmatmul.f32.gmra.mxu0 %v613
        %v1249 = vpop.f32.mrf.mxu0
        %v1250 = vadd.f32 %v990, %v1249
        %1251 = vmatmul.f32.gmra.mxu0 %v614
        %v1252 = vpop.f32.mrf.mxu0
        %v1253 = vadd.f32 %v993, %v1252
        %1254 = vmatmul.f32.gmra.mxu0 %v615
        %v1255 = vpop.f32.mrf.mxu0
        %v1256 = vadd.f32 %v996, %v1255
        %1257 = vmatmul.f32.gmra.mxu0 %v616
        %v1258 = vpop.f32.mrf.mxu0
        %v1259 = vadd.f32 %v999, %v1258
        %1260 = vmatmul.f32.gmra.mxu0 %v617
        %v1261 = vpop.f32.mrf.mxu0
        %v1262 = vadd.f32 %v1002, %v1261
        %1263 = vmatmul.f32.gmra.mxu0 %v618
        %v1264 = vpop.f32.mrf.mxu0
        %v1265 = vadd.f32 %v1005, %v1264
        %1266 = vmatmul.f32.gmra.mxu0 %v619
        %v1267 = vpop.f32.mrf.mxu0
        %v1268 = vadd.f32 %v1008, %v1267
        %1269 = vmatmul.f32.gmra.mxu0 %v620
        %v1270 = vpop.f32.mrf.mxu0
        %v1271 = vadd.f32 %v1011, %v1270
        %1272 = vmatmul.f32.gmra.mxu0 %v621
        %v1273 = vpop.f32.mrf.mxu0
        %v1274 = vadd.f32 %v1014, %v1273
        %1275 = vmatmul.f32.gmra.mxu0 %v622
        %v1276 = vpop.f32.mrf.mxu0
        %v1277 = vadd.f32 %v1017, %v1276
        %1278 = vmatmul.f32.gmra.mxu0 %v623
        %v1279 = vpop.f32.mrf.mxu0
        %v1280 = vadd.f32 %v1020, %v1279
        %1281 = vmatmul.f32.gmra.mxu0 %v624
        %v1282 = vpop.f32.mrf.mxu0
        %v1283 = vadd.f32 %v1023, %v1282
        %1284 = vmatmul.f32.gmra.mxu0 %v625
        %v1285 = vpop.f32.mrf.mxu0
        %v1286 = vadd.f32 %v1026, %v1285
        %1287 = vmatmul.f32.gmra.mxu0 %v626
        %v1288 = vpop.f32.mrf.mxu0
        %v1289 = vadd.f32 %v1029, %v1288
        %1290 = vmatmul.f32.gmra.mxu0 %v627
        %v1291 = vpop.f32.mrf.mxu0
        %v1292 = vadd.f32 %v1032, %v1291
        %1293 = vdwg.mxu0
        %s1294 = scalar_lea.vmem %s569, 256 [#allocation2]
        %v1295 = vld [vmem:[%s1294] sm:$0xff]
        %v1296 = vld [vmem:[%s1294 + $0x8] sm:$0xff]
        %v1297 = vld [vmem:[%s1294 + $0x10] sm:$0xff]
        %v1298 = vld [vmem:[%s1294 + $0x18] sm:$0xff]
        %v1299 = vld [vmem:[%s1294 + $0x20] sm:$0xff]
        %v1300 = vld [vmem:[%s1294 + $0x28] sm:$0xff]
        %v1301 = vld [vmem:[%s1294 + $0x30] sm:$0xff]
        %v1302 = vld [vmem:[%s1294 + $0x38] sm:$0xff]
        %v1303 = vld [vmem:[%s1294 + $0x40] sm:$0xff]
        %v1304 = vld [vmem:[%s1294 + $0x48] sm:$0xff]
        %v1305 = vld [vmem:[%s1294 + $0x50] sm:$0xff]
        %v1306 = vld [vmem:[%s1294 + $0x58] sm:$0xff]
        %v1307 = vld [vmem:[%s1294 + $0x60] sm:$0xff]
        %v1308 = vld [vmem:[%s1294 + $0x68] sm:$0xff]
        %v1309 = vld [vmem:[%s1294 + $0x70] sm:$0xff]
        %v1310 = vld [vmem:[%s1294 + $0x78] sm:$0xff]
        %s1311 = scalar_lea.vmem %s1, 1024
        %v1312 = vld [vmem:[%s1311] sm:$0xff]
        %v1313 = vld [vmem:[%s1311 + $0x8] sm:$0xff]
        %v1314 = vld [vmem:[%s1311 + $0x10] sm:$0xff]
        %v1315 = vld [vmem:[%s1311 + $0x18] sm:$0xff]
        %v1316 = vld [vmem:[%s1311 + $0x20] sm:$0xff]
        %v1317 = vld [vmem:[%s1311 + $0x28] sm:$0xff]
        %v1318 = vld [vmem:[%s1311 + $0x30] sm:$0xff]
        %v1319 = vld [vmem:[%s1311 + $0x38] sm:$0xff]
        %v1320 = vld [vmem:[%s1311 + $0x40] sm:$0xff]
        %v1321 = vld [vmem:[%s1311 + $0x48] sm:$0xff]
        %v1322 = vld [vmem:[%s1311 + $0x50] sm:$0xff]
        %v1323 = vld [vmem:[%s1311 + $0x58] sm:$0xff]
        %v1324 = vld [vmem:[%s1311 + $0x60] sm:$0xff]
        %v1325 = vld [vmem:[%s1311 + $0x68] sm:$0xff]
        %v1326 = vld [vmem:[%s1311 + $0x70] sm:$0xff]
        %v1327 = vld [vmem:[%s1311 + $0x78] sm:$0xff]
        %v1328 = vld [vmem:[%s1311 + $0x80] sm:$0xff]
        %v1329 = vld [vmem:[%s1311 + $0x88] sm:$0xff]
        %v1330 = vld [vmem:[%s1311 + $0x90] sm:$0xff]
        %v1331 = vld [vmem:[%s1311 + $0x98] sm:$0xff]
        %v1332 = vld [vmem:[%s1311 + $0xa0] sm:$0xff]
        %v1333 = vld [vmem:[%s1311 + $0xa8] sm:$0xff]
        %v1334 = vld [vmem:[%s1311 + $0xb0] sm:$0xff]
        %v1335 = vld [vmem:[%s1311 + $0xb8] sm:$0xff]
        %v1336 = vld [vmem:[%s1311 + $0xc0] sm:$0xff]
        %v1337 = vld [vmem:[%s1311 + $0xc8] sm:$0xff]
        %v1338 = vld [vmem:[%s1311 + $0xd0] sm:$0xff]
        %v1339 = vld [vmem:[%s1311 + $0xd8] sm:$0xff]
        %v1340 = vld [vmem:[%s1311 + $0xe0] sm:$0xff]
        %v1341 = vld [vmem:[%s1311 + $0xe8] sm:$0xff]
        %v1342 = vld [vmem:[%s1311 + $0xf0] sm:$0xff]
        %v1343 = vld [vmem:[%s1311 + $0xf8] sm:$0xff]
        %v1344 = vld [vmem:[%s1311 + $0x100] sm:$0xff]
        %v1345 = vld [vmem:[%s1311 + $0x108] sm:$0xff]
        %v1346 = vld [vmem:[%s1311 + $0x110] sm:$0xff]
        %v1347 = vld [vmem:[%s1311 + $0x118] sm:$0xff]
        %v1348 = vld [vmem:[%s1311 + $0x120] sm:$0xff]
        %v1349 = vld [vmem:[%s1311 + $0x128] sm:$0xff]
        %v1350 = vld [vmem:[%s1311 + $0x130] sm:$0xff]
        %v1351 = vld [vmem:[%s1311 + $0x138] sm:$0xff]
        %v1352 = vld [vmem:[%s1311 + $0x140] sm:$0xff]
        %v1353 = vld [vmem:[%s1311 + $0x148] sm:$0xff]
        %v1354 = vld [vmem:[%s1311 + $0x150] sm:$0xff]
        %v1355 = vld [vmem:[%s1311 + $0x158] sm:$0xff]
        %v1356 = vld [vmem:[%s1311 + $0x160] sm:$0xff]
        %v1357 = vld [vmem:[%s1311 + $0x168] sm:$0xff]
        %v1358 = vld [vmem:[%s1311 + $0x170] sm:$0xff]
        %v1359 = vld [vmem:[%s1311 + $0x178] sm:$0xff]
        %v1360 = vld [vmem:[%s1311 + $0x180] sm:$0xff]
        %v1361 = vld [vmem:[%s1311 + $0x188] sm:$0xff]
        %v1362 = vld [vmem:[%s1311 + $0x190] sm:$0xff]
        %v1363 = vld [vmem:[%s1311 + $0x198] sm:$0xff]
        %v1364 = vld [vmem:[%s1311 + $0x1a0] sm:$0xff]
        %v1365 = vld [vmem:[%s1311 + $0x1a8] sm:$0xff]
        %v1366 = vld [vmem:[%s1311 + $0x1b0] sm:$0xff]
        %v1367 = vld [vmem:[%s1311 + $0x1b8] sm:$0xff]
        %v1368 = vld [vmem:[%s1311 + $0x1c0] sm:$0xff]
        %v1369 = vld [vmem:[%s1311 + $0x1c8] sm:$0xff]
        %v1370 = vld [vmem:[%s1311 + $0x1d0] sm:$0xff]
        %v1371 = vld [vmem:[%s1311 + $0x1d8] sm:$0xff]
        %v1372 = vld [vmem:[%s1311 + $0x1e0] sm:$0xff]
        %v1373 = vld [vmem:[%s1311 + $0x1e8] sm:$0xff]
        %v1374 = vld [vmem:[%s1311 + $0x1f0] sm:$0xff]
        %v1375 = vld [vmem:[%s1311 + $0x1f8] sm:$0xff]
        %1376 = vmatpush.msra.mxu0 %v1372
        %1377 = vmatpush.msra.mxu0 %v1368
        %1378 = vmatpush.msra.mxu0 %v1364
        %1379 = vmatpush.msra.mxu0 %v1360
        %1380 = vmatpush.msra.mxu0 %v1356
        %1381 = vmatpush.msra.mxu0 %v1352
        %1382 = vmatpush.msra.mxu0 %v1348
        %1383 = vmatpush.msra.mxu0 %v1344
        %1384 = vmatpush.msra.mxu0 %v1340
        %1385 = vmatpush.msra.mxu0 %v1336
        %1386 = vmatpush.msra.mxu0 %v1332
        %1387 = vmatpush.msra.mxu0 %v1328
        %1388 = vmatpush.msra.mxu0 %v1324
        %1389 = vmatpush.msra.mxu0 %v1320
        %1390 = vmatpush.msra.mxu0 %v1316
        %1391 = vmatpush.msra.mxu0 %v1312
        %1392 = vmatmul.f32.gmra.mxu0 %v1295
        %v1393 = vpop.f32.mrf.mxu0
        %v1394 = vadd.f32 0.0, %v1393
        %1395 = vmatmul.f32.gmra.mxu0 %v1296
        %v1396 = vpop.f32.mrf.mxu0
        %v1397 = vadd.f32 0.0, %v1396
        %1398 = vmatmul.f32.gmra.mxu0 %v1297
        %v1399 = vpop.f32.mrf.mxu0
        %v1400 = vadd.f32 0.0, %v1399
        %1401 = vmatmul.f32.gmra.mxu0 %v1298
        %v1402 = vpop.f32.mrf.mxu0
        %v1403 = vadd.f32 0.0, %v1402
        %1404 = vmatmul.f32.gmra.mxu0 %v1299
        %v1405 = vpop.f32.mrf.mxu0
        %v1406 = vadd.f32 0.0, %v1405
        %1407 = vmatmul.f32.gmra.mxu0 %v1300
        %v1408 = vpop.f32.mrf.mxu0
        %v1409 = vadd.f32 0.0, %v1408
        %1410 = vmatmul.f32.gmra.mxu0 %v1301
        %v1411 = vpop.f32.mrf.mxu0
        %v1412 = vadd.f32 0.0, %v1411
        %1413 = vmatmul.f32.gmra.mxu0 %v1302
        %v1414 = vpop.f32.mrf.mxu0
        %v1415 = vadd.f32 0.0, %v1414
        %1416 = vmatmul.f32.gmra.mxu0 %v1303
        %v1417 = vpop.f32.mrf.mxu0
        %v1418 = vadd.f32 0.0, %v1417
        %1419 = vmatmul.f32.gmra.mxu0 %v1304
        %v1420 = vpop.f32.mrf.mxu0
        %v1421 = vadd.f32 0.0, %v1420
        %1422 = vmatmul.f32.gmra.mxu0 %v1305
        %v1423 = vpop.f32.mrf.mxu0
        %v1424 = vadd.f32 0.0, %v1423
        %1425 = vmatmul.f32.gmra.mxu0 %v1306
        %v1426 = vpop.f32.mrf.mxu0
        %v1427 = vadd.f32 0.0, %v1426
        %1428 = vmatmul.f32.gmra.mxu0 %v1307
        %v1429 = vpop.f32.mrf.mxu0
        %v1430 = vadd.f32 0.0, %v1429
        %1431 = vmatmul.f32.gmra.mxu0 %v1308
        %v1432 = vpop.f32.mrf.mxu0
        %v1433 = vadd.f32 0.0, %v1432
        %1434 = vmatmul.f32.gmra.mxu0 %v1309
        %v1435 = vpop.f32.mrf.mxu0
        %v1436 = vadd.f32 0.0, %v1435
        %1437 = vmatmul.f32.gmra.mxu0 %v1310
        %v1438 = vpop.f32.mrf.mxu0
        %v1439 = vadd.f32 0.0, %v1438
        %1440 = vdwg.mxu0
        %1441 = vmatpush.msra.mxu0 %v1373
        %1442 = vmatpush.msra.mxu0 %v1369
        %1443 = vmatpush.msra.mxu0 %v1365
        %1444 = vmatpush.msra.mxu0 %v1361
        %1445 = vmatpush.msra.mxu0 %v1357
        %1446 = vmatpush.msra.mxu0 %v1353
        %1447 = vmatpush.msra.mxu0 %v1349
        %1448 = vmatpush.msra.mxu0 %v1345
        %1449 = vmatpush.msra.mxu0 %v1341
        %1450 = vmatpush.msra.mxu0 %v1337
        %1451 = vmatpush.msra.mxu0 %v1333
        %1452 = vmatpush.msra.mxu0 %v1329
        %1453 = vmatpush.msra.mxu0 %v1325
        %1454 = vmatpush.msra.mxu0 %v1321
        %1455 = vmatpush.msra.mxu0 %v1317
        %1456 = vmatpush.msra.mxu0 %v1313
        %1457 = vmatmul.f32.gmra.mxu0 %v1295
        %v1458 = vpop.f32.mrf.mxu0
        %v1459 = vadd.f32 0.0, %v1458
        %1460 = vmatmul.f32.gmra.mxu0 %v1296
        %v1461 = vpop.f32.mrf.mxu0
        %v1462 = vadd.f32 0.0, %v1461
        %1463 = vmatmul.f32.gmra.mxu0 %v1297
        %v1464 = vpop.f32.mrf.mxu0
        %v1465 = vadd.f32 0.0, %v1464
        %1466 = vmatmul.f32.gmra.mxu0 %v1298
        %v1467 = vpop.f32.mrf.mxu0
        %v1468 = vadd.f32 0.0, %v1467
        %1469 = vmatmul.f32.gmra.mxu0 %v1299
        %v1470 = vpop.f32.mrf.mxu0
        %v1471 = vadd.f32 0.0, %v1470
        %1472 = vmatmul.f32.gmra.mxu0 %v1300
        %v1473 = vpop.f32.mrf.mxu0
        %v1474 = vadd.f32 0.0, %v1473
        %1475 = vmatmul.f32.gmra.mxu0 %v1301
        %v1476 = vpop.f32.mrf.mxu0
        %v1477 = vadd.f32 0.0, %v1476
        %1478 = vmatmul.f32.gmra.mxu0 %v1302
        %v1479 = vpop.f32.mrf.mxu0
        %v1480 = vadd.f32 0.0, %v1479
        %1481 = vmatmul.f32.gmra.mxu0 %v1303
        %v1482 = vpop.f32.mrf.mxu0
        %v1483 = vadd.f32 0.0, %v1482
        %1484 = vmatmul.f32.gmra.mxu0 %v1304
        %v1485 = vpop.f32.mrf.mxu0
        %v1486 = vadd.f32 0.0, %v1485
        %1487 = vmatmul.f32.gmra.mxu0 %v1305
        %v1488 = vpop.f32.mrf.mxu0
        %v1489 = vadd.f32 0.0, %v1488
        %1490 = vmatmul.f32.gmra.mxu0 %v1306
        %v1491 = vpop.f32.mrf.mxu0
        %v1492 = vadd.f32 0.0, %v1491
        %1493 = vmatmul.f32.gmra.mxu0 %v1307
        %v1494 = vpop.f32.mrf.mxu0
        %v1495 = vadd.f32 0.0, %v1494
        %1496 = vmatmul.f32.gmra.mxu0 %v1308
        %v1497 = vpop.f32.mrf.mxu0
        %v1498 = vadd.f32 0.0, %v1497
        %1499 = vmatmul.f32.gmra.mxu0 %v1309
        %v1500 = vpop.f32.mrf.mxu0
        %v1501 = vadd.f32 0.0, %v1500
        %1502 = vmatmul.f32.gmra.mxu0 %v1310
        %v1503 = vpop.f32.mrf.mxu0
        %v1504 = vadd.f32 0.0, %v1503
        %1505 = vdwg.mxu0
        %1506 = vmatpush.msra.mxu0 %v1374
        %1507 = vmatpush.msra.mxu0 %v1370
        %1508 = vmatpush.msra.mxu0 %v1366
        %1509 = vmatpush.msra.mxu0 %v1362
        %1510 = vmatpush.msra.mxu0 %v1358
        %1511 = vmatpush.msra.mxu0 %v1354
        %1512 = vmatpush.msra.mxu0 %v1350
        %1513 = vmatpush.msra.mxu0 %v1346
        %1514 = vmatpush.msra.mxu0 %v1342
        %1515 = vmatpush.msra.mxu0 %v1338
        %1516 = vmatpush.msra.mxu0 %v1334
        %1517 = vmatpush.msra.mxu0 %v1330
        %1518 = vmatpush.msra.mxu0 %v1326
        %1519 = vmatpush.msra.mxu0 %v1322
        %1520 = vmatpush.msra.mxu0 %v1318
        %1521 = vmatpush.msra.mxu0 %v1314
        %1522 = vmatmul.f32.gmra.mxu0 %v1295
        %v1523 = vpop.f32.mrf.mxu0
        %v1524 = vadd.f32 0.0, %v1523
        %1525 = vmatmul.f32.gmra.mxu0 %v1296
        %v1526 = vpop.f32.mrf.mxu0
        %v1527 = vadd.f32 0.0, %v1526
        %1528 = vmatmul.f32.gmra.mxu0 %v1297
        %v1529 = vpop.f32.mrf.mxu0
        %v1530 = vadd.f32 0.0, %v1529
        %1531 = vmatmul.f32.gmra.mxu0 %v1298
        %v1532 = vpop.f32.mrf.mxu0
        %v1533 = vadd.f32 0.0, %v1532
        %1534 = vmatmul.f32.gmra.mxu0 %v1299
        %v1535 = vpop.f32.mrf.mxu0
        %v1536 = vadd.f32 0.0, %v1535
        %1537 = vmatmul.f32.gmra.mxu0 %v1300
        %v1538 = vpop.f32.mrf.mxu0
        %v1539 = vadd.f32 0.0, %v1538
        %1540 = vmatmul.f32.gmra.mxu0 %v1301
        %v1541 = vpop.f32.mrf.mxu0
        %v1542 = vadd.f32 0.0, %v1541
        %1543 = vmatmul.f32.gmra.mxu0 %v1302
        %v1544 = vpop.f32.mrf.mxu0
        %v1545 = vadd.f32 0.0, %v1544
        %1546 = vmatmul.f32.gmra.mxu0 %v1303
        %v1547 = vpop.f32.mrf.mxu0
        %v1548 = vadd.f32 0.0, %v1547
        %1549 = vmatmul.f32.gmra.mxu0 %v1304
        %v1550 = vpop.f32.mrf.mxu0
        %v1551 = vadd.f32 0.0, %v1550
        %1552 = vmatmul.f32.gmra.mxu0 %v1305
        %v1553 = vpop.f32.mrf.mxu0
        %v1554 = vadd.f32 0.0, %v1553
        %1555 = vmatmul.f32.gmra.mxu0 %v1306
        %v1556 = vpop.f32.mrf.mxu0
        %v1557 = vadd.f32 0.0, %v1556
        %1558 = vmatmul.f32.gmra.mxu0 %v1307
        %v1559 = vpop.f32.mrf.mxu0
        %v1560 = vadd.f32 0.0, %v1559
        %1561 = vmatmul.f32.gmra.mxu0 %v1308
        %v1562 = vpop.f32.mrf.mxu0
        %v1563 = vadd.f32 0.0, %v1562
        %1564 = vmatmul.f32.gmra.mxu0 %v1309
        %v1565 = vpop.f32.mrf.mxu0
        %v1566 = vadd.f32 0.0, %v1565
        %1567 = vmatmul.f32.gmra.mxu0 %v1310
        %v1568 = vpop.f32.mrf.mxu0
        %v1569 = vadd.f32 0.0, %v1568
        %1570 = vdwg.mxu0
        %1571 = vmatpush.msra.mxu0 %v1375
        %1572 = vmatpush.msra.mxu0 %v1371
        %1573 = vmatpush.msra.mxu0 %v1367
        %1574 = vmatpush.msra.mxu0 %v1363
        %1575 = vmatpush.msra.mxu0 %v1359
        %1576 = vmatpush.msra.mxu0 %v1355
        %1577 = vmatpush.msra.mxu0 %v1351
        %1578 = vmatpush.msra.mxu0 %v1347
        %1579 = vmatpush.msra.mxu0 %v1343
        %1580 = vmatpush.msra.mxu0 %v1339
        %1581 = vmatpush.msra.mxu0 %v1335
        %1582 = vmatpush.msra.mxu0 %v1331
        %1583 = vmatpush.msra.mxu0 %v1327
        %1584 = vmatpush.msra.mxu0 %v1323
        %1585 = vmatpush.msra.mxu0 %v1319
        %1586 = vmatpush.msra.mxu0 %v1315
        %1587 = vmatmul.f32.gmra.mxu0 %v1295
        %v1588 = vpop.f32.mrf.mxu0
        %v1589 = vadd.f32 0.0, %v1588
        %1590 = vmatmul.f32.gmra.mxu0 %v1296
        %v1591 = vpop.f32.mrf.mxu0
        %v1592 = vadd.f32 0.0, %v1591
        %1593 = vmatmul.f32.gmra.mxu0 %v1297
        %v1594 = vpop.f32.mrf.mxu0
        %v1595 = vadd.f32 0.0, %v1594
        %1596 = vmatmul.f32.gmra.mxu0 %v1298
        %v1597 = vpop.f32.mrf.mxu0
        %v1598 = vadd.f32 0.0, %v1597
        %1599 = vmatmul.f32.gmra.mxu0 %v1299
        %v1600 = vpop.f32.mrf.mxu0
        %v1601 = vadd.f32 0.0, %v1600
        %1602 = vmatmul.f32.gmra.mxu0 %v1300
        %v1603 = vpop.f32.mrf.mxu0
        %v1604 = vadd.f32 0.0, %v1603
        %1605 = vmatmul.f32.gmra.mxu0 %v1301
        %v1606 = vpop.f32.mrf.mxu0
        %v1607 = vadd.f32 0.0, %v1606
        %1608 = vmatmul.f32.gmra.mxu0 %v1302
        %v1609 = vpop.f32.mrf.mxu0
        %v1610 = vadd.f32 0.0, %v1609
        %1611 = vmatmul.f32.gmra.mxu0 %v1303
        %v1612 = vpop.f32.mrf.mxu0
        %v1613 = vadd.f32 0.0, %v1612
        %1614 = vmatmul.f32.gmra.mxu0 %v1304
        %v1615 = vpop.f32.mrf.mxu0
        %v1616 = vadd.f32 0.0, %v1615
        %1617 = vmatmul.f32.gmra.mxu0 %v1305
        %v1618 = vpop.f32.mrf.mxu0
        %v1619 = vadd.f32 0.0, %v1618
        %1620 = vmatmul.f32.gmra.mxu0 %v1306
        %v1621 = vpop.f32.mrf.mxu0
        %v1622 = vadd.f32 0.0, %v1621
        %1623 = vmatmul.f32.gmra.mxu0 %v1307
        %v1624 = vpop.f32.mrf.mxu0
        %v1625 = vadd.f32 0.0, %v1624
        %1626 = vmatmul.f32.gmra.mxu0 %v1308
        %v1627 = vpop.f32.mrf.mxu0
        %v1628 = vadd.f32 0.0, %v1627
        %1629 = vmatmul.f32.gmra.mxu0 %v1309
        %v1630 = vpop.f32.mrf.mxu0
        %v1631 = vadd.f32 0.0, %v1630
        %1632 = vmatmul.f32.gmra.mxu0 %v1310
        %v1633 = vpop.f32.mrf.mxu0
        %v1634 = vadd.f32 0.0, %v1633
        %1635 = vdwg.mxu0
        %v1636 = vadd.f32 %v1052, %v1394
        %v1637 = vadd.f32 %v1117, %v1459
        %v1638 = vadd.f32 %v1182, %v1524
        %v1639 = vadd.f32 %v1247, %v1589
        %v1640 = vadd.f32 %v1055, %v1397
        %v1641 = vadd.f32 %v1120, %v1462
        %v1642 = vadd.f32 %v1185, %v1527
        %v1643 = vadd.f32 %v1250, %v1592
        %v1644 = vadd.f32 %v1058, %v1400
        %v1645 = vadd.f32 %v1123, %v1465
        %v1646 = vadd.f32 %v1188, %v1530
        %v1647 = vadd.f32 %v1253, %v1595
        %v1648 = vadd.f32 %v1061, %v1403
        %v1649 = vadd.f32 %v1126, %v1468
        %v1650 = vadd.f32 %v1191, %v1533
        %v1651 = vadd.f32 %v1256, %v1598
        %v1652 = vadd.f32 %v1064, %v1406
        %v1653 = vadd.f32 %v1129, %v1471
        %v1654 = vadd.f32 %v1194, %v1536
        %v1655 = vadd.f32 %v1259, %v1601
        %v1656 = vadd.f32 %v1067, %v1409
        %v1657 = vadd.f32 %v1132, %v1474
        %v1658 = vadd.f32 %v1197, %v1539
        %v1659 = vadd.f32 %v1262, %v1604
        %v1660 = vadd.f32 %v1070, %v1412
        %v1661 = vadd.f32 %v1135, %v1477
        %v1662 = vadd.f32 %v1200, %v1542
        %v1663 = vadd.f32 %v1265, %v1607
        %v1664 = vadd.f32 %v1073, %v1415
        %v1665 = vadd.f32 %v1138, %v1480
        %v1666 = vadd.f32 %v1203, %v1545
        %v1667 = vadd.f32 %v1268, %v1610
        %v1668 = vadd.f32 %v1076, %v1418
        %v1669 = vadd.f32 %v1141, %v1483
        %v1670 = vadd.f32 %v1206, %v1548
        %v1671 = vadd.f32 %v1271, %v1613
        %v1672 = vadd.f32 %v1079, %v1421
        %v1673 = vadd.f32 %v1144, %v1486
        %v1674 = vadd.f32 %v1209, %v1551
        %v1675 = vadd.f32 %v1274, %v1616
        %v1676 = vadd.f32 %v1082, %v1424
        %v1677 = vadd.f32 %v1147, %v1489
        %v1678 = vadd.f32 %v1212, %v1554
        %v1679 = vadd.f32 %v1277, %v1619
        %v1680 = vadd.f32 %v1085, %v1427
        %v1681 = vadd.f32 %v1150, %v1492
        %v1682 = vadd.f32 %v1215, %v1557
        %v1683 = vadd.f32 %v1280, %v1622
        %v1684 = vadd.f32 %v1088, %v1430
        %v1685 = vadd.f32 %v1153, %v1495
        %v1686 = vadd.f32 %v1218, %v1560
        %v1687 = vadd.f32 %v1283, %v1625
        %v1688 = vadd.f32 %v1091, %v1433
        %v1689 = vadd.f32 %v1156, %v1498
        %v1690 = vadd.f32 %v1221, %v1563
        %v1691 = vadd.f32 %v1286, %v1628
        %v1692 = vadd.f32 %v1094, %v1436
        %v1693 = vadd.f32 %v1159, %v1501
        %v1694 = vadd.f32 %v1224, %v1566
        %v1695 = vadd.f32 %v1289, %v1631
        %v1696 = vadd.f32 %v1097, %v1439
        %v1697 = vadd.f32 %v1162, %v1504
        %v1698 = vadd.f32 %v1227, %v1569
        %v1699 = vadd.f32 %v1292, %v1634
        %v1700 = vld [vmem:[%s2] sm:$0xf]
        %v1702 = vperm.slane %v1700, 0
        %v1703 = vperm.slane %v1700, 1
        %v1704 = vperm.slane %v1700, 2
        %v1705 = vperm.slane %v1700, 3
        %v1710 = vadd.f32 %v1636, %v1702
        %v1711 = vadd.f32 %v1637, %v1703
        %v1712 = vadd.f32 %v1638, %v1704
        %v1713 = vadd.f32 %v1639, %v1705
        %v1714 = vadd.f32 %v1640, %v1702
        %v1715 = vadd.f32 %v1641, %v1703
        %v1716 = vadd.f32 %v1642, %v1704
        %v1717 = vadd.f32 %v1643, %v1705
        %v1718 = vadd.f32 %v1644, %v1702
        %v1719 = vadd.f32 %v1645, %v1703
        %v1720 = vadd.f32 %v1646, %v1704
        %v1721 = vadd.f32 %v1647, %v1705
        %v1722 = vadd.f32 %v1648, %v1702
        %v1723 = vadd.f32 %v1649, %v1703
        %v1724 = vadd.f32 %v1650, %v1704
        %v1725 = vadd.f32 %v1651, %v1705
        %v1726 = vadd.f32 %v1652, %v1702
        %v1727 = vadd.f32 %v1653, %v1703
        %v1728 = vadd.f32 %v1654, %v1704
        %v1729 = vadd.f32 %v1655, %v1705
        %v1730 = vadd.f32 %v1656, %v1702
        %v1731 = vadd.f32 %v1657, %v1703
        %v1732 = vadd.f32 %v1658, %v1704
        %v1733 = vadd.f32 %v1659, %v1705
        %v1734 = vadd.f32 %v1660, %v1702
        %v1735 = vadd.f32 %v1661, %v1703
        %v1736 = vadd.f32 %v1662, %v1704
        %v1737 = vadd.f32 %v1663, %v1705
        %v1738 = vadd.f32 %v1664, %v1702
        %v1739 = vadd.f32 %v1665, %v1703
        %v1740 = vadd.f32 %v1666, %v1704
        %v1741 = vadd.f32 %v1667, %v1705
        %v1742 = vadd.f32 %v1668, %v1702
        %v1743 = vadd.f32 %v1669, %v1703
        %v1744 = vadd.f32 %v1670, %v1704
        %v1745 = vadd.f32 %v1671, %v1705
        %v1746 = vadd.f32 %v1672, %v1702
        %v1747 = vadd.f32 %v1673, %v1703
        %v1748 = vadd.f32 %v1674, %v1704
        %v1749 = vadd.f32 %v1675, %v1705
        %v1750 = vadd.f32 %v1676, %v1702
        %v1751 = vadd.f32 %v1677, %v1703
        %v1752 = vadd.f32 %v1678, %v1704
        %v1753 = vadd.f32 %v1679, %v1705
        %v1754 = vadd.f32 %v1680, %v1702
        %v1755 = vadd.f32 %v1681, %v1703
        %v1756 = vadd.f32 %v1682, %v1704
        %v1757 = vadd.f32 %v1683, %v1705
        %v1758 = vadd.f32 %v1684, %v1702
        %v1759 = vadd.f32 %v1685, %v1703
        %v1760 = vadd.f32 %v1686, %v1704
        %v1761 = vadd.f32 %v1687, %v1705
        %v1762 = vadd.f32 %v1688, %v1702
        %v1763 = vadd.f32 %v1689, %v1703
        %v1764 = vadd.f32 %v1690, %v1704
        %v1765 = vadd.f32 %v1691, %v1705
        %v1766 = vadd.f32 %v1692, %v1702
        %v1767 = vadd.f32 %v1693, %v1703
        %v1768 = vadd.f32 %v1694, %v1704
        %v1769 = vadd.f32 %v1695, %v1705
        %v1770 = vadd.f32 %v1696, %v1702
        %v1771 = vadd.f32 %v1697, %v1703
        %v1772 = vadd.f32 %v1698, %v1704
        %v1773 = vadd.f32 %v1699, %v1705
        %v1774 = vmax.f32 %v1710, 0.0
        %v1775 = vmax.f32 %v1711, 0.0
        %v1776 = vmax.f32 %v1712, 0.0
        %v1777 = vmax.f32 %v1713, 0.0
        %v1778 = vmax.f32 %v1714, 0.0
        %v1779 = vmax.f32 %v1715, 0.0
        %v1780 = vmax.f32 %v1716, 0.0
        %v1781 = vmax.f32 %v1717, 0.0
        %v1782 = vmax.f32 %v1718, 0.0
        %v1783 = vmax.f32 %v1719, 0.0
        %v1784 = vmax.f32 %v1720, 0.0
        %v1785 = vmax.f32 %v1721, 0.0
        %v1786 = vmax.f32 %v1722, 0.0
        %v1787 = vmax.f32 %v1723, 0.0
        %v1788 = vmax.f32 %v1724, 0.0
        %v1789 = vmax.f32 %v1725, 0.0
        %v1790 = vmax.f32 %v1726, 0.0
        %v1791 = vmax.f32 %v1727, 0.0
        %v1792 = vmax.f32 %v1728, 0.0
        %v1793 = vmax.f32 %v1729, 0.0
        %v1794 = vmax.f32 %v1730, 0.0
        %v1795 = vmax.f32 %v1731, 0.0
        %v1796 = vmax.f32 %v1732, 0.0
        %v1797 = vmax.f32 %v1733, 0.0
        %v1798 = vmax.f32 %v1734, 0.0
        %v1799 = vmax.f32 %v1735, 0.0
        %v1800 = vmax.f32 %v1736, 0.0
        %v1801 = vmax.f32 %v1737, 0.0
        %v1802 = vmax.f32 %v1738, 0.0
        %v1803 = vmax.f32 %v1739, 0.0
        %v1804 = vmax.f32 %v1740, 0.0
        %v1805 = vmax.f32 %v1741, 0.0
        %v1806 = vmax.f32 %v1742, 0.0
        %v1807 = vmax.f32 %v1743, 0.0
        %v1808 = vmax.f32 %v1744, 0.0
        %v1809 = vmax.f32 %v1745, 0.0
        %v1810 = vmax.f32 %v1746, 0.0
        %v1811 = vmax.f32 %v1747, 0.0
        %v1812 = vmax.f32 %v1748, 0.0
        %v1813 = vmax.f32 %v1749, 0.0
        %v1814 = vmax.f32 %v1750, 0.0
        %v1815 = vmax.f32 %v1751, 0.0
        %v1816 = vmax.f32 %v1752, 0.0
        %v1817 = vmax.f32 %v1753, 0.0
        %v1818 = vmax.f32 %v1754, 0.0
        %v1819 = vmax.f32 %v1755, 0.0
        %v1820 = vmax.f32 %v1756, 0.0
        %v1821 = vmax.f32 %v1757, 0.0
        %v1822 = vmax.f32 %v1758, 0.0
        %v1823 = vmax.f32 %v1759, 0.0
        %v1824 = vmax.f32 %v1760, 0.0
        %v1825 = vmax.f32 %v1761, 0.0
        %v1826 = vmax.f32 %v1762, 0.0
        %v1827 = vmax.f32 %v1763, 0.0
        %v1828 = vmax.f32 %v1764, 0.0
        %v1829 = vmax.f32 %v1765, 0.0
        %v1830 = vmax.f32 %v1766, 0.0
        %v1831 = vmax.f32 %v1767, 0.0
        %v1832 = vmax.f32 %v1768, 0.0
        %v1833 = vmax.f32 %v1769, 0.0
        %v1834 = vmax.f32 %v1770, 0.0
        %v1835 = vmax.f32 %v1771, 0.0
        %v1836 = vmax.f32 %v1772, 0.0
        %v1837 = vmax.f32 %v1773, 0.0
        %v1838 = vld [vmem:[%s3] sm:$0xff]
        %v1839 = vld [vmem:[%s3 + $0x8] sm:$0xff]
        %v1840 = vld [vmem:[%s3 + $0x10] sm:$0xff]
        %v1841 = vld [vmem:[%s3 + $0x18] sm:$0xff]
        %v1842 = vld [vmem:[%s3 + $0x20] sm:$0xff]
        %v1843 = vld [vmem:[%s3 + $0x28] sm:$0xff]
        %v1844 = vld [vmem:[%s3 + $0x30] sm:$0xff]
        %v1845 = vld [vmem:[%s3 + $0x38] sm:$0xff]
        %v1846 = vld [vmem:[%s3 + $0x40] sm:$0xff]
        %v1847 = vld [vmem:[%s3 + $0x48] sm:$0xff]
        %v1848 = vld [vmem:[%s3 + $0x50] sm:$0xff]
        %v1849 = vld [vmem:[%s3 + $0x58] sm:$0xff]
        %v1850 = vld [vmem:[%s3 + $0x60] sm:$0xff]
        %v1851 = vld [vmem:[%s3 + $0x68] sm:$0xff]
        %v1852 = vld [vmem:[%s3 + $0x70] sm:$0xff]
        %v1853 = vld [vmem:[%s3 + $0x78] sm:$0xff]
        %v1854 = vld [vmem:[%s3 + $0x80] sm:$0xff]
        %v1855 = vld [vmem:[%s3 + $0x88] sm:$0xff]
        %v1856 = vld [vmem:[%s3 + $0x90] sm:$0xff]
        %v1857 = vld [vmem:[%s3 + $0x98] sm:$0xff]
        %v1858 = vld [vmem:[%s3 + $0xa0] sm:$0xff]
        %v1859 = vld [vmem:[%s3 + $0xa8] sm:$0xff]
        %v1860 = vld [vmem:[%s3 + $0xb0] sm:$0xff]
        %v1861 = vld [vmem:[%s3 + $0xb8] sm:$0xff]
        %v1862 = vld [vmem:[%s3 + $0xc0] sm:$0xff]
        %v1863 = vld [vmem:[%s3 + $0xc8] sm:$0xff]
        %v1864 = vld [vmem:[%s3 + $0xd0] sm:$0xff]
        %v1865 = vld [vmem:[%s3 + $0xd8] sm:$0xff]
        %v1866 = vld [vmem:[%s3 + $0xe0] sm:$0xff]
        %v1867 = vld [vmem:[%s3 + $0xe8] sm:$0xff]
        %v1868 = vld [vmem:[%s3 + $0xf0] sm:$0xff]
        %v1869 = vld [vmem:[%s3 + $0xf8] sm:$0xff]
        %v1870 = vld [vmem:[%s3 + $0x100] sm:$0xff]
        %v1871 = vld [vmem:[%s3 + $0x108] sm:$0xff]
        %v1872 = vld [vmem:[%s3 + $0x110] sm:$0xff]
        %v1873 = vld [vmem:[%s3 + $0x118] sm:$0xff]
        %v1874 = vld [vmem:[%s3 + $0x120] sm:$0xff]
        %v1875 = vld [vmem:[%s3 + $0x128] sm:$0xff]
        %v1876 = vld [vmem:[%s3 + $0x130] sm:$0xff]
        %v1877 = vld [vmem:[%s3 + $0x138] sm:$0xff]
        %v1878 = vld [vmem:[%s3 + $0x140] sm:$0xff]
        %v1879 = vld [vmem:[%s3 + $0x148] sm:$0xff]
        %v1880 = vld [vmem:[%s3 + $0x150] sm:$0xff]
        %v1881 = vld [vmem:[%s3 + $0x158] sm:$0xff]
        %v1882 = vld [vmem:[%s3 + $0x160] sm:$0xff]
        %v1883 = vld [vmem:[%s3 + $0x168] sm:$0xff]
        %v1884 = vld [vmem:[%s3 + $0x170] sm:$0xff]
        %v1885 = vld [vmem:[%s3 + $0x178] sm:$0xff]
        %v1886 = vld [vmem:[%s3 + $0x180] sm:$0xff]
        %v1887 = vld [vmem:[%s3 + $0x188] sm:$0xff]
        %v1888 = vld [vmem:[%s3 + $0x190] sm:$0xff]
        %v1889 = vld [vmem:[%s3 + $0x198] sm:$0xff]
        %v1890 = vld [vmem:[%s3 + $0x1a0] sm:$0xff]
        %v1891 = vld [vmem:[%s3 + $0x1a8] sm:$0xff]
        %v1892 = vld [vmem:[%s3 + $0x1b0] sm:$0xff]
        %v1893 = vld [vmem:[%s3 + $0x1b8] sm:$0xff]
        %v1894 = vld [vmem:[%s3 + $0x1c0] sm:$0xff]
        %v1895 = vld [vmem:[%s3 + $0x1c8] sm:$0xff]
        %v1896 = vld [vmem:[%s3 + $0x1d0] sm:$0xff]
        %v1897 = vld [vmem:[%s3 + $0x1d8] sm:$0xff]
        %v1898 = vld [vmem:[%s3 + $0x1e0] sm:$0xff]
        %v1899 = vld [vmem:[%s3 + $0x1e8] sm:$0xff]
        %v1900 = vld [vmem:[%s3 + $0x1f0] sm:$0xff]
        %v1901 = vld [vmem:[%s3 + $0x1f8] sm:$0xff]
        %1902 = vmatpush.msra.mxu0 %v1853
        %1903 = vmatpush.msra.mxu0 %v1852
        %1904 = vmatpush.msra.mxu0 %v1851
        %1905 = vmatpush.msra.mxu0 %v1850
        %1906 = vmatpush.msra.mxu0 %v1849
        %1907 = vmatpush.msra.mxu0 %v1848
        %1908 = vmatpush.msra.mxu0 %v1847
        %1909 = vmatpush.msra.mxu0 %v1846
        %1910 = vmatpush.msra.mxu0 %v1845
        %1911 = vmatpush.msra.mxu0 %v1844
        %1912 = vmatpush.msra.mxu0 %v1843
        %1913 = vmatpush.msra.mxu0 %v1842
        %1914 = vmatpush.msra.mxu0 %v1841
        %1915 = vmatpush.msra.mxu0 %v1840
        %1916 = vmatpush.msra.mxu0 %v1839
        %1917 = vmatpush.msra.mxu0 %v1838
        %1918 = vmatmul.f32.gmra.mxu0 %v1774
        %v1919 = vpop.f32.mrf.mxu0
        %v1920 = vadd.f32 0.0, %v1919
        %1921 = vmatmul.f32.gmra.mxu0 %v1778
        %v1922 = vpop.f32.mrf.mxu0
        %v1923 = vadd.f32 0.0, %v1922
        %1924 = vmatmul.f32.gmra.mxu0 %v1782
        %v1925 = vpop.f32.mrf.mxu0
        %v1926 = vadd.f32 0.0, %v1925
        %1927 = vmatmul.f32.gmra.mxu0 %v1786
        %v1928 = vpop.f32.mrf.mxu0
        %v1929 = vadd.f32 0.0, %v1928
        %1930 = vmatmul.f32.gmra.mxu0 %v1790
        %v1931 = vpop.f32.mrf.mxu0
        %v1932 = vadd.f32 0.0, %v1931
        %1933 = vmatmul.f32.gmra.mxu0 %v1794
        %v1934 = vpop.f32.mrf.mxu0
        %v1935 = vadd.f32 0.0, %v1934
        %1936 = vmatmul.f32.gmra.mxu0 %v1798
        %v1937 = vpop.f32.mrf.mxu0
        %v1938 = vadd.f32 0.0, %v1937
        %1939 = vmatmul.f32.gmra.mxu0 %v1802
        %v1940 = vpop.f32.mrf.mxu0
        %v1941 = vadd.f32 0.0, %v1940
        %1942 = vmatmul.f32.gmra.mxu0 %v1806
        %v1943 = vpop.f32.mrf.mxu0
        %v1944 = vadd.f32 0.0, %v1943
        %1945 = vmatmul.f32.gmra.mxu0 %v1810
        %v1946 = vpop.f32.mrf.mxu0
        %v1947 = vadd.f32 0.0, %v1946
        %1948 = vmatmul.f32.gmra.mxu0 %v1814
        %v1949 = vpop.f32.mrf.mxu0
        %v1950 = vadd.f32 0.0, %v1949
        %1951 = vmatmul.f32.gmra.mxu0 %v1818
        %v1952 = vpop.f32.mrf.mxu0
        %v1953 = vadd.f32 0.0, %v1952
        %1954 = vmatmul.f32.gmra.mxu0 %v1822
        %v1955 = vpop.f32.mrf.mxu0
        %v1956 = vadd.f32 0.0, %v1955
        %1957 = vmatmul.f32.gmra.mxu0 %v1826
        %v1958 = vpop.f32.mrf.mxu0
        %v1959 = vadd.f32 0.0, %v1958
        %1960 = vmatmul.f32.gmra.mxu0 %v1830
        %v1961 = vpop.f32.mrf.mxu0
        %v1962 = vadd.f32 0.0, %v1961
        %1963 = vmatmul.f32.gmra.mxu0 %v1834
        %v1964 = vpop.f32.mrf.mxu0
        %v1965 = vadd.f32 0.0, %v1964
        %1966 = vdwg.mxu0
        %1967 = vmatpush.msra.mxu0 %v1869
        %1968 = vmatpush.msra.mxu0 %v1868
        %1969 = vmatpush.msra.mxu0 %v1867
        %1970 = vmatpush.msra.mxu0 %v1866
        %1971 = vmatpush.msra.mxu0 %v1865
        %1972 = vmatpush.msra.mxu0 %v1864
        %1973 = vmatpush.msra.mxu0 %v1863
        %1974 = vmatpush.msra.mxu0 %v1862
        %1975 = vmatpush.msra.mxu0 %v1861
        %1976 = vmatpush.msra.mxu0 %v1860
        %1977 = vmatpush.msra.mxu0 %v1859
        %1978 = vmatpush.msra.mxu0 %v1858
        %1979 = vmatpush.msra.mxu0 %v1857
        %1980 = vmatpush.msra.mxu0 %v1856
        %1981 = vmatpush.msra.mxu0 %v1855
        %1982 = vmatpush.msra.mxu0 %v1854
        %1983 = vmatmul.f32.gmra.mxu0 %v1775
        %v1984 = vpop.f32.mrf.mxu0
        %v1985 = vadd.f32 %v1920, %v1984
        %1986 = vmatmul.f32.gmra.mxu0 %v1779
        %v1987 = vpop.f32.mrf.mxu0
        %v1988 = vadd.f32 %v1923, %v1987
        %1989 = vmatmul.f32.gmra.mxu0 %v1783
        %v1990 = vpop.f32.mrf.mxu0
        %v1991 = vadd.f32 %v1926, %v1990
        %1992 = vmatmul.f32.gmra.mxu0 %v1787
        %v1993 = vpop.f32.mrf.mxu0
        %v1994 = vadd.f32 %v1929, %v1993
        %1995 = vmatmul.f32.gmra.mxu0 %v1791
        %v1996 = vpop.f32.mrf.mxu0
        %v1997 = vadd.f32 %v1932, %v1996
        %1998 = vmatmul.f32.gmra.mxu0 %v1795
        %v1999 = vpop.f32.mrf.mxu0
        %v2000 = vadd.f32 %v1935, %v1999
        %2001 = vmatmul.f32.gmra.mxu0 %v1799
        %v2002 = vpop.f32.mrf.mxu0
        %v2003 = vadd.f32 %v1938, %v2002
        %2004 = vmatmul.f32.gmra.mxu0 %v1803
        %v2005 = vpop.f32.mrf.mxu0
        %v2006 = vadd.f32 %v1941, %v2005
        %2007 = vmatmul.f32.gmra.mxu0 %v1807
        %v2008 = vpop.f32.mrf.mxu0
        %v2009 = vadd.f32 %v1944, %v2008
        %2010 = vmatmul.f32.gmra.mxu0 %v1811
        %v2011 = vpop.f32.mrf.mxu0
        %v2012 = vadd.f32 %v1947, %v2011
        %2013 = vmatmul.f32.gmra.mxu0 %v1815
        %v2014 = vpop.f32.mrf.mxu0
        %v2015 = vadd.f32 %v1950, %v2014
        %2016 = vmatmul.f32.gmra.mxu0 %v1819
        %v2017 = vpop.f32.mrf.mxu0
        %v2018 = vadd.f32 %v1953, %v2017
        %2019 = vmatmul.f32.gmra.mxu0 %v1823
        %v2020 = vpop.f32.mrf.mxu0
        %v2021 = vadd.f32 %v1956, %v2020
        %2022 = vmatmul.f32.gmra.mxu0 %v1827
        %v2023 = vpop.f32.mrf.mxu0
        %v2024 = vadd.f32 %v1959, %v2023
        %2025 = vmatmul.f32.gmra.mxu0 %v1831
        %v2026 = vpop.f32.mrf.mxu0
        %v2027 = vadd.f32 %v1962, %v2026
        %2028 = vmatmul.f32.gmra.mxu0 %v1835
        %v2029 = vpop.f32.mrf.mxu0
        %v2030 = vadd.f32 %v1965, %v2029
        %2031 = vdwg.mxu0
        %2032 = vmatpush.msra.mxu0 %v1885
        %2033 = vmatpush.msra.mxu0 %v1884
        %2034 = vmatpush.msra.mxu0 %v1883
        %2035 = vmatpush.msra.mxu0 %v1882
        %2036 = vmatpush.msra.mxu0 %v1881
        %2037 = vmatpush.msra.mxu0 %v1880
        %2038 = vmatpush.msra.mxu0 %v1879
        %2039 = vmatpush.msra.mxu0 %v1878
        %2040 = vmatpush.msra.mxu0 %v1877
        %2041 = vmatpush.msra.mxu0 %v1876
        %2042 = vmatpush.msra.mxu0 %v1875
        %2043 = vmatpush.msra.mxu0 %v1874
        %2044 = vmatpush.msra.mxu0 %v1873
        %2045 = vmatpush.msra.mxu0 %v1872
        %2046 = vmatpush.msra.mxu0 %v1871
        %2047 = vmatpush.msra.mxu0 %v1870
        %2048 = vmatmul.f32.gmra.mxu0 %v1776
        %v2049 = vpop.f32.mrf.mxu0
        %v2050 = vadd.f32 %v1985, %v2049
        %2051 = vmatmul.f32.gmra.mxu0 %v1780
        %v2052 = vpop.f32.mrf.mxu0
        %v2053 = vadd.f32 %v1988, %v2052
        %2054 = vmatmul.f32.gmra.mxu0 %v1784
        %v2055 = vpop.f32.mrf.mxu0
        %v2056 = vadd.f32 %v1991, %v2055
        %2057 = vmatmul.f32.gmra.mxu0 %v1788
        %v2058 = vpop.f32.mrf.mxu0
        %v2059 = vadd.f32 %v1994, %v2058
        %2060 = vmatmul.f32.gmra.mxu0 %v1792
        %v2061 = vpop.f32.mrf.mxu0
        %v2062 = vadd.f32 %v1997, %v2061
        %2063 = vmatmul.f32.gmra.mxu0 %v1796
        %v2064 = vpop.f32.mrf.mxu0
        %v2065 = vadd.f32 %v2000, %v2064
        %2066 = vmatmul.f32.gmra.mxu0 %v1800
        %v2067 = vpop.f32.mrf.mxu0
        %v2068 = vadd.f32 %v2003, %v2067
        %2069 = vmatmul.f32.gmra.mxu0 %v1804
        %v2070 = vpop.f32.mrf.mxu0
        %v2071 = vadd.f32 %v2006, %v2070
        %2072 = vmatmul.f32.gmra.mxu0 %v1808
        %v2073 = vpop.f32.mrf.mxu0
        %v2074 = vadd.f32 %v2009, %v2073
        %2075 = vmatmul.f32.gmra.mxu0 %v1812
        %v2076 = vpop.f32.mrf.mxu0
        %v2077 = vadd.f32 %v2012, %v2076
        %2078 = vmatmul.f32.gmra.mxu0 %v1816
        %v2079 = vpop.f32.mrf.mxu0
        %v2080 = vadd.f32 %v2015, %v2079
        %2081 = vmatmul.f32.gmra.mxu0 %v1820
        %v2082 = vpop.f32.mrf.mxu0
        %v2083 = vadd.f32 %v2018, %v2082
        %2084 = vmatmul.f32.gmra.mxu0 %v1824
        %v2085 = vpop.f32.mrf.mxu0
        %v2086 = vadd.f32 %v2021, %v2085
        %2087 = vmatmul.f32.gmra.mxu0 %v1828
        %v2088 = vpop.f32.mrf.mxu0
        %v2089 = vadd.f32 %v2024, %v2088
        %2090 = vmatmul.f32.gmra.mxu0 %v1832
        %v2091 = vpop.f32.mrf.mxu0
        %v2092 = vadd.f32 %v2027, %v2091
        %2093 = vmatmul.f32.gmra.mxu0 %v1836
        %v2094 = vpop.f32.mrf.mxu0
        %v2095 = vadd.f32 %v2030, %v2094
        %2096 = vdwg.mxu0
        %2097 = vmatpush.msra.mxu0 %v1901
        %2098 = vmatpush.msra.mxu0 %v1900
        %2099 = vmatpush.msra.mxu0 %v1899
        %2100 = vmatpush.msra.mxu0 %v1898
        %2101 = vmatpush.msra.mxu0 %v1897
        %2102 = vmatpush.msra.mxu0 %v1896
        %2103 = vmatpush.msra.mxu0 %v1895
        %2104 = vmatpush.msra.mxu0 %v1894
        %2105 = vmatpush.msra.mxu0 %v1893
        %2106 = vmatpush.msra.mxu0 %v1892
        %2107 = vmatpush.msra.mxu0 %v1891
        %2108 = vmatpush.msra.mxu0 %v1890
        %2109 = vmatpush.msra.mxu0 %v1889
        %2110 = vmatpush.msra.mxu0 %v1888
        %2111 = vmatpush.msra.mxu0 %v1887
        %2112 = vmatpush.msra.mxu0 %v1886
        %2113 = vmatmul.f32.gmra.mxu0 %v1777
        %v2114 = vpop.f32.mrf.mxu0
        %v2115 = vadd.f32 %v2050, %v2114
        %2116 = vmatmul.f32.gmra.mxu0 %v1781
        %v2117 = vpop.f32.mrf.mxu0
        %v2118 = vadd.f32 %v2053, %v2117
        %2119 = vmatmul.f32.gmra.mxu0 %v1785
        %v2120 = vpop.f32.mrf.mxu0
        %v2121 = vadd.f32 %v2056, %v2120
        %2122 = vmatmul.f32.gmra.mxu0 %v1789
        %v2123 = vpop.f32.mrf.mxu0
        %v2124 = vadd.f32 %v2059, %v2123
        %2125 = vmatmul.f32.gmra.mxu0 %v1793
        %v2126 = vpop.f32.mrf.mxu0
        %v2127 = vadd.f32 %v2062, %v2126
        %2128 = vmatmul.f32.gmra.mxu0 %v1797
        %v2129 = vpop.f32.mrf.mxu0
        %v2130 = vadd.f32 %v2065, %v2129
        %2131 = vmatmul.f32.gmra.mxu0 %v1801
        %v2132 = vpop.f32.mrf.mxu0
        %v2133 = vadd.f32 %v2068, %v2132
        %2134 = vmatmul.f32.gmra.mxu0 %v1805
        %v2135 = vpop.f32.mrf.mxu0
        %v2136 = vadd.f32 %v2071, %v2135
        %2137 = vmatmul.f32.gmra.mxu0 %v1809
        %v2138 = vpop.f32.mrf.mxu0
        %v2139 = vadd.f32 %v2074, %v2138
        %2140 = vmatmul.f32.gmra.mxu0 %v1813
        %v2141 = vpop.f32.mrf.mxu0
        %v2142 = vadd.f32 %v2077, %v2141
        %2143 = vmatmul.f32.gmra.mxu0 %v1817
        %v2144 = vpop.f32.mrf.mxu0
        %v2145 = vadd.f32 %v2080, %v2144
        %2146 = vmatmul.f32.gmra.mxu0 %v1821
        %v2147 = vpop.f32.mrf.mxu0
        %v2148 = vadd.f32 %v2083, %v2147
        %2149 = vmatmul.f32.gmra.mxu0 %v1825
        %v2150 = vpop.f32.mrf.mxu0
        %v2151 = vadd.f32 %v2086, %v2150
        %2152 = vmatmul.f32.gmra.mxu0 %v1829
        %v2153 = vpop.f32.mrf.mxu0
        %v2154 = vadd.f32 %v2089, %v2153
        %2155 = vmatmul.f32.gmra.mxu0 %v1833
        %v2156 = vpop.f32.mrf.mxu0
        %v2157 = vadd.f32 %v2092, %v2156
        %2158 = vmatmul.f32.gmra.mxu0 %v1837
        %v2159 = vpop.f32.mrf.mxu0
        %v2160 = vadd.f32 %v2095, %v2159
        %2161 = vdwg.mxu0
        %v2162 = vld [vmem:[%s4] sm:$0xff]
        %2163 = vmatpush.msra.mxu0 %v2160
        %2164 = vmatpush.msra.mxu0 %v2157
        %2165 = vmatpush.msra.mxu0 %v2154
        %2166 = vmatpush.msra.mxu0 %v2151
        %2167 = vmatpush.msra.mxu0 %v2148
        %2168 = vmatpush.msra.mxu0 %v2145
        %2169 = vmatpush.msra.mxu0 %v2142
        %2170 = vmatpush.msra.mxu0 %v2139
        %2171 = vmatpush.msra.mxu0 %v2136
        %2172 = vmatpush.msra.mxu0 %v2133
        %2173 = vmatpush.msra.mxu0 %v2130
        %2174 = vmatpush.msra.mxu0 %v2127
        %2175 = vmatpush.msra.mxu0 %v2124
        %2176 = vmatpush.msra.mxu0 %v2121
        %2177 = vmatpush.msra.mxu0 %v2118
        %2178 = vmatpush.msra.mxu0 %v2115
        %2179 = vmatmul.f32.gmra.mxu0 %v2162
        %v2180 = vpop.f32.mrf.mxu0
        %v2181 = vadd.f32 0.0, %v2180
        %2182 = vdwg.mxu0
        %v2183 = vld [vmem:[%s5] sm:$0xff]
        %v2184 = vld [vmem:[%s5 + $0x8] sm:$0xff]
        %v2185 = vld [vmem:[%s5 + $0x10] sm:$0xff]
        %v2186 = vld [vmem:[%s5 + $0x18] sm:$0xff]
        %v2187 = vld [vmem:[%s5 + $0x20] sm:$0xff]
        %v2188 = vld [vmem:[%s5 + $0x28] sm:$0xff]
        %v2189 = vld [vmem:[%s5 + $0x30] sm:$0xff]
        %v2190 = vld [vmem:[%s5 + $0x38] sm:$0xff]
        %v2191 = vld [vmem:[%s5 + $0x40] sm:$0xff]
        %v2192 = vld [vmem:[%s5 + $0x48] sm:$0xff]
        %v2193 = vld [vmem:[%s5 + $0x50] sm:$0xff]
        %v2194 = vld [vmem:[%s5 + $0x58] sm:$0xff]
        %v2195 = vld [vmem:[%s5 + $0x60] sm:$0xff]
        %v2196 = vld [vmem:[%s5 + $0x68] sm:$0xff]
        %v2197 = vld [vmem:[%s5 + $0x70] sm:$0xff]
        %v2198 = vld [vmem:[%s5 + $0x78] sm:$0xff]
        %v2199 = vld [vmem:[%s6] sm:$0x1]
        %v2201 = vperm.slane %v2199, 0
        %2203 = vmatpush.msra.mxu0 %v2198
        %2204 = vmatpush.msra.mxu0 %v2197
        %2205 = vmatpush.msra.mxu0 %v2196
        %2206 = vmatpush.msra.mxu0 %v2195
        %2207 = vmatpush.msra.mxu0 %v2194
        %2208 = vmatpush.msra.mxu0 %v2193
        %2209 = vmatpush.msra.mxu0 %v2192
        %2210 = vmatpush.msra.mxu0 %v2191
        %2211 = vmatpush.msra.mxu0 %v2190
        %2212 = vmatpush.msra.mxu0 %v2189
        %2213 = vmatpush.msra.mxu0 %v2188
        %2214 = vmatpush.msra.mxu0 %v2187
        %2215 = vmatpush.msra.mxu0 %v2186
        %2216 = vmatpush.msra.mxu0 %v2185
        %2217 = vmatpush.msra.mxu0 %v2184
        %2218 = vmatpush.msra.mxu0 %v2183
        %2219 = vmatmul.f32.gmra.mxu0 %v2181
        %v2220 = vpop.f32.mrf.mxu0
        %v2221 = vadd.f32 %v2201, %v2220
        %2222 = vdwg.mxu0
        %v2223 = vmax.f32 %v2221, 0.0
        %v2224 = vld [vmem:[%s7] sm:$0xff]
        %v2225 = vld [vmem:[%s7 + $0x8] sm:$0xff]
        %v2226 = vld [vmem:[%s7 + $0x10] sm:$0xff]
        %v2227 = vld [vmem:[%s7 + $0x18] sm:$0xff]
        %v2228 = vld [vmem:[%s7 + $0x20] sm:$0xff]
        %v2229 = vld [vmem:[%s7 + $0x28] sm:$0xff]
        %v2230 = vld [vmem:[%s7 + $0x30] sm:$0xff]
        %v2231 = vld [vmem:[%s7 + $0x38] sm:$0xff]
        %v2232 = vld [vmem:[%s7 + $0x40] sm:$0xff]
        %v2233 = vld [vmem:[%s7 + $0x48] sm:$0xff]
        %v2234 = vld [vmem:[%s7 + $0x50] sm:$0xff]
        %v2235 = vld [vmem:[%s7 + $0x58] sm:$0xff]
        %v2236 = vld [vmem:[%s7 + $0x60] sm:$0xff]
        %v2237 = vld [vmem:[%s7 + $0x68] sm:$0xff]
        %v2238 = vld [vmem:[%s7 + $0x70] sm:$0xff]
        %v2239 = vld [vmem:[%s7 + $0x78] sm:$0xff]
        %v2240 = vld [vmem:[%s8] sm:$0x1]
        %v2242 = vperm.slane %v2240, 0
        %2244 = vmatpush.msra.mxu0 %v2239
        %2245 = vmatpush.msra.mxu0 %v2238
        %2246 = vmatpush.msra.mxu0 %v2237
        %2247 = vmatpush.msra.mxu0 %v2236
        %2248 = vmatpush.msra.mxu0 %v2235
        %2249 = vmatpush.msra.mxu0 %v2234
        %2250 = vmatpush.msra.mxu0 %v2233
        %2251 = vmatpush.msra.mxu0 %v2232
        %2252 = vmatpush.msra.mxu0 %v2231
        %2253 = vmatpush.msra.mxu0 %v2230
        %2254 = vmatpush.msra.mxu0 %v2229
        %2255 = vmatpush.msra.mxu0 %v2228
        %2256 = vmatpush.msra.mxu0 %v2227
        %2257 = vmatpush.msra.mxu0 %v2226
        %2258 = vmatpush.msra.mxu0 %v2225
        %2259 = vmatpush.msra.mxu0 %v2224
        %2260 = vmatmul.f32.gmra.mxu0 %v2223
        %v2261 = vpop.f32.mrf.mxu0
        %v2262 = vadd.f32 %v2242, %v2261
        %2263 = vdwg.mxu0
        %v2264 = vmul.f32 %v2262, %v2262
        %vm2265 = vcmask 1043456
        %v2266 = vsel %vm2265, %v2264, 0.0
        %2267 = vadd.xlane.f32.xlu0 %v2266
        %v2268 = vpop.xlane.xlu0 %2267
        %v2269 = vrsqrt.pop %v2268
        %v2270 = vmul.f32 %v2269, %v2268
        %v2271 = vmul.f32 %v2270, %v2269
        %v2272 = vmul.f32 0.5, %v2271
        %v2273 = vsub.f32 1.5, %v2272
        %v2274 = vmul.f32 %v2269, %v2273
        %vm2275 = vweird.f32 %v2268
        %vm2276 = vweird.f32 %v2269
        %vm2277 = vmor %vm2275, %vm2276
        %v2278 = vsel %vm2277, %v2269, %v2274
        %v2280 = vrot.slane %v2278, 4
        %v2282 = vsel %vm2265, %v2278, %v2280
        %2284 = vset.pattern.permute.xlu0 0
        %2285 = vperm.xlu0 %2284, %v2282
        %v2286 = vpop.permute.xlu0 %2285
        %v2288 = vmul.f32 %v2262, %v2286
        %v2289 = vld [vmem:[%s9] sm:$0xff]
        %v2290 = vld [vmem:[%s9 + $0x8] sm:$0xff]
        %v2291 = vld [vmem:[%s9 + $0x10] sm:$0xff]
        %v2292 = vld [vmem:[%s9 + $0x18] sm:$0xff]
        %v2293 = vld [vmem:[%s9 + $0x20] sm:$0xff]
        %v2294 = vld [vmem:[%s9 + $0x28] sm:$0xff]
        %v2295 = vld [vmem:[%s9 + $0x30] sm:$0xff]
        %v2296 = vld [vmem:[%s9 + $0x38] sm:$0xff]
        %v2297 = vld [vmem:[%s9 + $0x40] sm:$0xff]
        %v2298 = vld [vmem:[%s9 + $0x48] sm:$0xff]
        %v2299 = vld [vmem:[%s9 + $0x50] sm:$0xff]
        %v2300 = vld [vmem:[%s9 + $0x58] sm:$0xff]
        %v2301 = vld [vmem:[%s9 + $0x60] sm:$0xff]
        %v2302 = vld [vmem:[%s9 + $0x68] sm:$0xff]
        %v2303 = vld [vmem:[%s9 + $0x70] sm:$0xff]
        %v2304 = vld [vmem:[%s9 + $0x78] sm:$0xff]
        %2305 = vmatpush.msra.mxu0 %v2304
        %2306 = vmatpush.msra.mxu0 %v2303
        %2307 = vmatpush.msra.mxu0 %v2302
        %2308 = vmatpush.msra.mxu0 %v2301
        %2309 = vmatpush.msra.mxu0 %v2300
        %2310 = vmatpush.msra.mxu0 %v2299
        %2311 = vmatpush.msra.mxu0 %v2298
        %2312 = vmatpush.msra.mxu0 %v2297
        %2313 = vmatpush.msra.mxu0 %v2296
        %2314 = vmatpush.msra.mxu0 %v2295
        %2315 = vmatpush.msra.mxu0 %v2294
        %2316 = vmatpush.msra.mxu0 %v2293
        %2317 = vmatpush.msra.mxu0 %v2292
        %2318 = vmatpush.msra.mxu0 %v2291
        %2319 = vmatpush.msra.mxu0 %v2290
        %2320 = vmatpush.msra.mxu0 %v2289
        %2321 = vmatmul.f32.gmra.mxu0 %v2288
        %v2322 = vpop.f32.mrf.mxu0
        %v2323 = vadd.f32 0.0, %v2322
        %2324 = vdwg.mxu0
        %v2325 = vmul.f32 %v2288, %v2288
        %2326 = vadd.xlane.f32.xlu0 %v2325
        %v2327 = vpop.xlane.xlu0 %2326
        %v2328 = vmul.f32 %v2323, 2.0
        %v2329 = vsub.f32 %v2327, %v2328
        %v2330 = vld [vmem:[%s10] sm:$0x1]
        %v2332 = vperm.slane %v2330, 0
        %v2334 = vadd.f32 %v2329, %v2332
        %v2335 = vmul.f32 %v2334, -0.5
        %2336 = vmax.xlane.f32.xlu0 %v2335
        %v2337 = vpop.xlane.xlu0 %2336
        %v2338 = vsub.f32 %v2335, %v2337
        %v2339 = vmul.f32 %v2338, 1.442695
        %v2340 = vpow.pop %v2339
        %2341 = vadd.xlane.f32.xlu0 %v2340
        %v2342 = vpop.xlane.xlu0 %2341
        %v2343 = vrcp.pop %v2342
        %v2344 = vmul.f32 %v2342, %v2343
        %v2345 = vsub.f32 1.0, %v2344
        %v2346 = vmul.f32 %v2343, %v2345
        %v2347 = vadd.f32 %v2343, %v2346
        %vm2348 = vweird.f32 %v2342
        %vm2349 = vweird.f32 %v2343
        %vm2350 = vmor %vm2348, %vm2349
        %v2351 = vsel %vm2350, %v2343, %v2347
        %v2352 = vand.u32 2147483647, %v2342
        %vm2353 = vcmp.eq.f32.partialorder %v2352, 8.507059e+37
        %v2354 = vand.u32 %v2342, 2147483648
        %v2355 = vor.u32 1.1754944e-38, %v2354
        %v2356 = vsel %vm2353, %v2355, %v2351
        %v2357 = vmul.f32 %v2340, %v2356
        %2358 = vst [vmem:[%s611 + $0x10] sm:$0xff] %v2357
        %2359 = vst [vmem:[%s611] sm:$0xff] %v2181
        %2360 = vst [vmem:[%s611 + $0x8] sm:$0xff] %v2288
        %p2361 = scmp.lt.s32.totalorder %s22, 1
        %s2362 = scalar_select %p2361, %s22, 1
        %s2363 = smul.addr %s2362, 3
        %s2364 = smul.addr %s2363, 8
        %s2365 = scalar_lea.vmem %s11, %s2364
        // Predicated region
        $region103: #{simclr_forward.1} parent=97 // pred_check
          %p2366 = pneg %p276
        $region104: #{simclr_forward.1} parent=97 // pred_check_branch
          %2368 = sbr.rel (%p2366) target = $region106
        $region105: #{simclr_forward.1} parent=97 // pred_region
          _
        $region106: #{simclr_forward.1} parent=97 // pred_fallthru
          _
      $region98: #{simclr_forward.1} parent=5 // pred_fallthru
        _
      %p2369 = scmp.le.s32.totalorder 2, %s17
      // Predicated region
      $region107: #{simclr_forward.1} parent=5 // pred_check
        %p2370 = pneg %p2369
      $region108: #{simclr_forward.1} parent=5 // pred_check_branch
        %2372 = sbr.rel (%p2370) target = $region110
      $region109: #{simclr_forward.1} parent=5 // pred_region
        %s2373 = ssub.s32 %s17, 2
        // Predicated region
        $region111: #{simclr_forward.1} parent=109 // pred_check
          %p2374 = pneg %p282
        $region112: #{simclr_forward.1} parent=109 // pred_check_branch
          %2376 = sbr.rel (%p2374) target = $region114
        $region113: #{simclr_forward.1} parent=109 // pred_region
          %p2377 = scmp.lt.s32.totalorder %s23, 1
          %s2378 = scalar_select %p2377, %s23, 1
          %s2379 = smul.addr %s2378, 3
          %s2380 = smul.addr %s2379, 8
          %s2381 = scalar_lea.vmem %s11, %s2380
        $region114: #{simclr_forward.1} parent=109 // pred_fallthru
          _
      $region110: #{simclr_forward.1} parent=5 // pred_fallthru
        _
    $region6: #{simclr_forward.1} parent=1 // loop_footer
      %s21 = sadd.s32 1, %s17
    $region7: #{simclr_forward.1} parent=1 // loop_footer_branch
      %16 = sbr.rel target = $region3
    $region8: #{simclr_forward.1} parent=1 // loop_exit
      _

</llo_original>
